<compile_context>
chip_gen: v7x
topology: tpu7x:2x2x1
jax: 0.10.0
libtpu: 0.0.40
codegen_flags: <defaults>
</compile_context>

<pallas_src>
import functools

import jax
import jax.numpy as jnp
from jax.experimental import pallas as pl
from jax.experimental.pallas import tpu as pltpu


_LANES = 128
# jnp.roll convention: roll(x, s)[i] == x[(i - s) % N].
_ROLL_LIKE_JNP_DEFAULT = True


@functools.lru_cache(maxsize=None)
def _roll_matches_jnp() -> bool:
    """Direction of pltpu.roll.

    Pinned to the jnp.roll convention; confirmed with a one-vreg hardware probe
    only when a TPU is reachable (skipped under AOT / no-TPU tracing, addressing
    the earlier review's correctness concern).  Any probe failure falls back to
    the pinned constant."""
    try:
        if jax.devices()[0].platform != "tpu":
            return _ROLL_LIKE_JNP_DEFAULT

        def probe(o_ref):
            x = jax.lax.broadcasted_iota(jnp.int32, (8, 128), 1)
            o_ref[...] = pltpu.roll(x, shift=1, axis=1)

        v = int(pl.pallas_call(
            probe, out_shape=jax.ShapeDtypeStruct((8, 128), jnp.int32))()[0, 0])
        if v == 127:
            return True       # jnp.roll convention
        if v == 1:
            return False      # reversed convention
        return _ROLL_LIKE_JNP_DEFAULT
    except Exception:
        return _ROLL_LIKE_JNP_DEFAULT


def _conv_sigmoid(mean_c, max_c, w_ref, h_idx, w_idx, *, H, W, k, pad,
                  roll_like_jnp):
    """2-in / 1-out k x k conv (implicit zero padding) on flat-H*W pooled maps,
    followed by an exact sigmoid.

    mean_c / max_c: (rows, HWp) f32 pooled maps (rows = batch rows in the block).
    h_idx / w_idx : (1, HWp) int32 per-lane spatial coordinates (-1 on pad lanes).

    Each tap is one XLU lane-rotate of the pre-weighted map plus a 0/1 boundary
    mask built from hoisted VPU compares; taps round-robin into 4 partial
    accumulators so the VALUs pipeline instead of serialising on one add chain.
    """
    HWp = mean_c.shape[-1]
    # Hoisted per-offset boundary predicates (the conv's implicit zero padding).
    h_ok = [(h_idx >= -(kh - pad)) & (h_idx < H - (kh - pad)) for kh in range(k)]
    w_ok = [(w_idx >= -(kw - pad)) & (w_idx < W - (kw - pad)) for kw in range(k)]

    accs = [jnp.zeros_like(mean_c) for _ in range(4)]
    for kh in range(k):
        dh = kh - pad
        for kw in range(k):
            dw = kw - pad
            t = kh * k + kw
            tap = w_ref[t] * mean_c + w_ref[k * k + t] * max_c        # VPU
            off = dh * W + dw
            if off != 0:
                shift = (-off) % HWp if roll_like_jnp else off % HWp
                tap = pltpu.roll(tap, shift=shift, axis=1)            # XLU
            mask = (h_ok[kh] & w_ok[kw]).astype(jnp.float32)          # (1, HWp)
            accs[t % 4] = accs[t % 4] + tap * mask
    conv = (accs[0] + accs[1]) + (accs[2] + accs[3])
    # Exact sigmoid: exp on the EUP, one true divide (O(HW) per block, off the
    # critical path) -- replaces the approximate reciprocal of the old version.
    return 1.0 / (1.0 + jnp.exp(-conv))


def _fused_kernel(x_ref, w_ref, hw_ref, o_ref, *, H, W, k, pad, roll_like_jnp):
    # x_ref : (bt, C, HWp) native dtype      w_ref : (2*k*k,) f32 in SMEM
    # hw_ref: (2, HWp) int32                 o_ref : (bt, C, HWp)
    C = x_ref.shape[1]
    xv = x_ref[...]
    # Channel pooling over the whole block (no per-batch unroll, no full f32
    # copy of x): f32 accumulation for the mean, exact max in the native dtype,
    # 1/C folded into a compile-time constant.
    mean_c = jnp.sum(xv, axis=1, dtype=jnp.float32) * (1.0 / C)       # (bt, HWp)
    max_c = jnp.max(xv, axis=1).astype(jnp.float32)                   # (bt, HWp)
    attn = _conv_sigmoid(mean_c, max_c, w_ref, hw_ref[0:1, :], hw_ref[1:2, :],
                         H=H, W=W, k=k, pad=pad, roll_like_jnp=roll_like_jnp)
    # Broadcast-multiply back onto the input; lane-dense store, native dtype.
    o_ref[...] = (xv * attn[:, None, :].astype(xv.dtype)).astype(o_ref.dtype)


def _attn_kernel(x_ref, w_ref, hw_ref, attn_ref, sum_sc, max_sc, *,
                 H, W, k, pad, roll_like_jnp, C_total):
    # Pass 1 of the C-tiled fallback.  Grid = (B, C // tc), channel axis last
    # ("arbitrary"): accumulate channel sum / max into VMEM scratch, then at the
    # last channel tile run the conv + sigmoid and emit the (1, 1, HWp) attention map.
    c = pl.program_id(1)
    xv = x_ref[...]                                        # (1, tc, HWp)
    part_sum = jnp.sum(xv, axis=1, dtype=jnp.float32)      # (1, HWp)
    part_max = jnp.max(xv, axis=1).astype(jnp.float32)     # (1, HWp)

    @pl.when(c == 0)
    def _():
        sum_sc[...] = part_sum
        max_sc[...] = part_max

    @pl.when(c > 0)
    def _():
        sum_sc[...] = sum_sc[...] + part_sum
        max_sc[...] = jnp.maximum(max_sc[...], part_max)

    @pl.when(c == pl.num_programs(1) - 1)
    def _():
        mean_c = sum_sc[...] * (1.0 / C_total)
        attn = _conv_sigmoid(mean_c, max_sc[...], w_ref,
                             hw_ref[0:1, :], hw_ref[1:2, :],
                             H=H, W=W, k=k, pad=pad, roll_like_jnp=roll_like_jnp)
        attn_ref[...] = attn[:, None, :]


def _apply_kernel(x_ref, attn_ref, o_ref):
    # Pass 2 of the C-tiled fallback: broadcast-multiply the attention map back
    # onto x with lane-dense (1, tc, HWp) blocks.
    xv = x_ref[...]
    o_ref[...] = (xv * attn_ref[...].astype(xv.dtype)).astype(o_ref.dtype)


def _vmem_limit_bytes(resident_block_bytes, vmem_cap):
    # input + output, each double-buffered, plus headroom for the small operands
    # (weights, index vectors) and in-kernel temporaries; never above capacity.
    want = 4 * resident_block_bytes + (8 << 20)
    return int(max(16 << 20, min(vmem_cap - (4 << 20), want)))


def spatial_attention(x, conv_weight, kernel_size=7, *, block_bytes=None):
    """x: (B, C, H, W); conv_weight: (1, 2, k, k) from nn.Conv2d(2, 1, k, bias=False).

    `block_bytes` optionally overrides the per-block byte budget (tuning / tests).
    """
    assert kernel_size in (3, 7), "kernel size must be 3 or 7"
    pad = 3 if kernel_size == 7 else 1
    B, C, H, W = x.shape
    HW = H * W
    HWp = ((HW + _LANES - 1) // _LANES) * _LANES

    # Lane-dense flat spatial axis (free reshape of contiguous NCHW); pad to a
    # multiple of 128 lanes only when required so stores stay unmasked.
    x2 = x.reshape(B, C, HW)
    if HWp != HW:
        x2 = jnp.pad(x2, ((0, 0), (0, 0), (0, HWp - HW)))

    # Flattened conv weight: [mean-channel taps | max-channel taps], row-major (kh, kw).
    w_flat = conv_weight.astype(jnp.float32).reshape(-1)

    # Per-lane (h, w) coordinates of the flat axis (-1 on pad lanes).  Replaces the
    # old (k*k, HW) f32 mask input with 2*HWp int32s.
    flat = jnp.arange(HWp, dtype=jnp.int32)
    h_idx = jnp.where(flat < HW, flat // W, -1)
    w_idx = jnp.where(flat < HW, flat % W, -1)
    hw_idx = jnp.stack([h_idx, w_idx], axis=0)             # (2, HWp) int32

    roll_like_jnp = _roll_matches_jnp()

    # ---- generation-aware block budgeting -----------------------------------
    try:
        vmem_cap = int(pltpu.get_tpu_info().vmem_capacity_bytes)
    except Exception:
        vmem_cap = 64 * 1024 * 1024        # conservative: v7x physical VMEM
    if block_bytes is None:
        # in+out double buffered => ~4x the block is resident; keep that under
        # ~half of VMEM: 16 MiB blocks on v5e/v6e (128 MiB), 8 MiB on v7x (64 MiB).
        block_bytes = vmem_cap // 8

    itemsize = jnp.dtype(x.dtype).itemsize
    per_batch = C * HWp * itemsize

    use_fused = per_batch <= block_bytes
    tc = C
    if not use_fused:
        tc_cap = max(1, block_bytes // (HWp * itemsize))
        cands = [d for d in range(8, C, 8) if C % d == 0 and d <= tc_cap]
        if cands:
            tc = max(cands)                # channel tile: multiple of 8, divides C
        else:
            use_fused = True               # no legal channel tile; take big blocks

    if use_fused:
        # ---- fused single pass: x is read from HBM exactly once, written once.
        bt = max(1, min(B, block_bytes // max(per_batch, 1)))
        if B >= 2:
            bt = min(bt, (B + 1) // 2)     # >=2 grid steps so v7x's 2 TCs both work
        grid = (pl.cdiv(B, bt),)           # partial last block OK (garbage rows discarded)
        vmem_limit = _vmem_limit_bytes(bt * per_batch, vmem_cap)

        kernel = functools.partial(
            _fused_kernel, H=H, W=W, k=kernel_size, pad=pad,
            roll_like_jnp=roll_like_jnp)
        out2 = pl.pallas_call(
            kernel,
            out_shape=jax.ShapeDtypeStruct((B, C, HWp), x.dtype),
            grid=grid,
            in_specs=[
                pl.BlockSpec((bt, C, HWp), lambda i: (i, 0, 0)),
                pl.BlockSpec(memory_space=pltpu.MemorySpace.SMEM),
                pl.BlockSpec((2, HWp), lambda i: (0, 0)),
            ],
            out_specs=pl.BlockSpec((bt, C, HWp), lambda i: (i, 0, 0)),
            compiler_params=pltpu.CompilerParams(
                dimension_semantics=("parallel",),
                vmem_limit_bytes=vmem_limit),
        )(x2, w_flat, hw_idx)
    else:
        # ---- C-tiled two-pass fallback: one batch row's C*HW slab exceeds the
        # per-block budget (e.g. large feature maps on v7x's 64 MiB VMEM).
        grid = (B, C // tc)
        vmem_limit = _vmem_limit_bytes(tc * HWp * itemsize, vmem_cap)

        attn_kernel = functools.partial(
            _attn_kernel, H=H, W=W, k=kernel_size, pad=pad,
            roll_like_jnp=roll_like_jnp, C_total=C)
        attn = pl.pallas_call(
            attn_kernel,
            out_shape=jax.ShapeDtypeStruct((B, 1, HWp), jnp.float32),
            grid=grid,
            in_specs=[
                pl.BlockSpec((1, tc, HWp), lambda b, c: (b, c, 0)),
                pl.BlockSpec(memory_space=pltpu.MemorySpace.SMEM),
                pl.BlockSpec((2, HWp), lambda b, c: (0, 0)),
            ],
            out_specs=pl.BlockSpec((1, 1, HWp), lambda b, c: (b, 0, 0)),
            scratch_shapes=[pltpu.VMEM((1, HWp), jnp.float32),
                            pltpu.VMEM((1, HWp), jnp.float32)],
            compiler_params=pltpu.CompilerParams(
                dimension_semantics=("parallel", "arbitrary"),
                vmem_limit_bytes=vmem_limit),
        )(x2, w_flat, hw_idx)

        out2 = pl.pallas_call(
            _apply_kernel,
            out_shape=jax.ShapeDtypeStruct((B, C, HWp), x.dtype),
            grid=grid,
            in_specs=[
                pl.BlockSpec((1, tc, HWp), lambda b, c: (b, c, 0)),
                pl.BlockSpec((1, 1, HWp), lambda b, c: (b, 0, 0)),
            ],
            out_specs=pl.BlockSpec((1, tc, HWp), lambda b, c: (b, c, 0)),
            compiler_params=pltpu.CompilerParams(
                dimension_semantics=("parallel", "parallel"),
                vmem_limit_bytes=vmem_limit),
        )(x2, attn)

    out2 = out2[..., :HW] if HWp != HW else out2
    return out2.reshape(B, C, H, W)


def _reference(x, conv_weight, kernel_size=7):
    """Pure-JAX reference matching the PyTorch forward."""
    pad = 3 if kernel_size == 7 else 1
    pooled = jnp.concatenate(
        [jnp.mean(x, axis=1, keepdims=True),
         jnp.max(x, axis=1, keepdims=True)], axis=1)              # (B, 2, H, W)
    conv = jax.lax.conv_general_dilated(
        pooled, conv_weight, window_strides=(1, 1),
        padding=[(pad, pad), (pad, pad)],
        dimension_numbers=("NCHW", "OIHW", "NCHW"))
    return x * jax.nn.sigmoid(conv)


if __name__ == "__main__":
    key = jax.random.PRNGKey(0)
    key_x, key_w, key_x2, key_w2 = jax.random.split(key, 4)

    # Primary config: module default (kernel_size=7) at a small shape; exercises
    # the fused single-pass path with a 2-step "parallel" batch grid.
    B, C, H, W = 2, 4, 16, 16
    ksize = 7
    x = jax.random.normal(key_x, (B, C, H, W), dtype=jnp.float32)
    conv_weight = 0.1 * jax.random.normal(key_w, (1, 2, ksize, ksize),
                                          dtype=jnp.float32)

    out = jax.block_until_ready(spatial_attention(x, conv_weight, kernel_size=ksize))
    ref = _reference(x, conv_weight, kernel_size=ksize)
    assert out.shape == (B, C, H, W)
    assert jnp.allclose(out, ref, atol=1e-4, rtol=1e-4), "fused path mismatch"

    # Secondary config: exercises lane padding (H*W=64 -> 128 lanes) and the
    # C-tiled two-pass fallback (per-block budget forced tiny so tc=8 < C=16).
    B2, C2, H2, W2 = 2, 16, 8, 8
    ksize2 = 3
    x_b = jax.random.normal(key_x2, (B2, C2, H2, W2), dtype=jnp.float32)
    w_b = 0.1 * jax.random.normal(key_w2, (1, 2, ksize2, ksize2), dtype=jnp.float32)
    out_b = jax.block_until_ready(
        spatial_attention(x_b, w_b, kernel_size=ksize2, block_bytes=4096))
    ref_b = _reference(x_b, w_b, kernel_size=ksize2)
    assert jnp.allclose(out_b, ref_b, atol=1e-4, rtol=1e-4), "C-tiled path mismatch"

    print("KERNEL_OK")
</pallas_src>

<mosaic_0001>
module attributes {stable_mosaic.version = 11 : i64} {
  func.func @_fused_kernel(%arg0: i32, %arg1: memref<1x4x256xf32, #tpu.memory_space<vmem>>, %arg2: memref<98xf32, #tpu.memory_space<smem>>, %arg3: memref<2x256xi32, #tpu.memory_space<vmem>>, %arg4: memref<1x4x256xf32, #tpu.memory_space<vmem>>) attributes {dimension_semantics = [#tpu.dimension_semantics<parallel>], iteration_bounds = array<i64: 2>, scalar_prefetch = 0 : i64, scratch_operands = 0 : i64, tpu.core_type = #tpu.core_type<tc>, window_params = [{transform_indices = @transform_0, window_bounds = array<i64: 1, 4, 256>}, {transform_indices = @transform_1, window_bounds = array<i64: 98>}, {pipeline_mode = #tpu.pipeline_mode<synchronous>, transform_indices = @transform_2, window_bounds = array<i64: 2, 256>}, {transform_indices = @transform_3, window_bounds = array<i64: 1, 4, 256>}]} {
    %c0 = arith.constant 0 : index
    %c0_0 = arith.constant 0 : index
    %c0_1 = arith.constant 0 : index
    %0 = vector.load %arg1[%c0, %c0_0, %c0_1] : memref<1x4x256xf32, #tpu.memory_space<vmem>>, vector<1x4x256xf32>
    %cst = arith.constant dense<0.000000e+00> : vector<1x256xf32>
    %1 = vector.multi_reduction <add>, %0, %cst [1] : vector<1x4x256xf32> to vector<1x256xf32>
    %cst_2 = arith.constant 2.500000e-01 : f32
    %2 = vector.broadcast %cst_2 : f32 to vector<1x256xf32>
    %3 = arith.mulf %1, %2 : vector<1x256xf32>
    %cst_3 = arith.constant dense<0xFF800000> : vector<1x256xf32>
    %4 = vector.multi_reduction <maximumf>, %0, %cst_3 [1] : vector<1x4x256xf32> to vector<1x256xf32>
    %c0_4 = arith.constant 0 : index
    %c0_5 = arith.constant 0 : index
    %5 = vector.load %arg3[%c0_4, %c0_5] : memref<2x256xi32, #tpu.memory_space<vmem>>, vector<1x256xi32>
    %c1 = arith.constant 1 : index
    %c0_6 = arith.constant 0 : index
    %6 = vector.load %arg3[%c1, %c0_6] : memref<2x256xi32, #tpu.memory_space<vmem>>, vector<1x256xi32>
    %c3_i32 = arith.constant 3 : i32
    %7 = vector.broadcast %c3_i32 : i32 to vector<1x256xi32>
    %8 = arith.cmpi sge, %5, %7 : vector<1x256xi32>
    %c19_i32 = arith.constant 19 : i32
    %9 = vector.broadcast %c19_i32 : i32 to vector<1x256xi32>
    %10 = arith.cmpi slt, %5, %9 : vector<1x256xi32>
    %11 = arith.andi %8, %10 : vector<1x256xi1>
    %c2_i32 = arith.constant 2 : i32
    %12 = vector.broadcast %c2_i32 : i32 to vector<1x256xi32>
    %13 = arith.cmpi sge, %5, %12 : vector<1x256xi32>
    %c18_i32 = arith.constant 18 : i32
    %14 = vector.broadcast %c18_i32 : i32 to vector<1x256xi32>
    %15 = arith.cmpi slt, %5, %14 : vector<1x256xi32>
    %16 = arith.andi %13, %15 : vector<1x256xi1>
    %c1_i32 = arith.constant 1 : i32
    %17 = vector.broadcast %c1_i32 : i32 to vector<1x256xi32>
    %18 = arith.cmpi sge, %5, %17 : vector<1x256xi32>
    %c17_i32 = arith.constant 17 : i32
    %19 = vector.broadcast %c17_i32 : i32 to vector<1x256xi32>
    %20 = arith.cmpi slt, %5, %19 : vector<1x256xi32>
    %21 = arith.andi %18, %20 : vector<1x256xi1>
    %c0_i32 = arith.constant 0 : i32
    %22 = vector.broadcast %c0_i32 : i32 to vector<1x256xi32>
    %23 = arith.cmpi sge, %5, %22 : vector<1x256xi32>
    %c16_i32 = arith.constant 16 : i32
    %24 = vector.broadcast %c16_i32 : i32 to vector<1x256xi32>
    %25 = arith.cmpi slt, %5, %24 : vector<1x256xi32>
    %26 = arith.andi %23, %25 : vector<1x256xi1>
    %c-1_i32 = arith.constant -1 : i32
    %27 = vector.broadcast %c-1_i32 : i32 to vector<1x256xi32>
    %28 = arith.cmpi sge, %5, %27 : vector<1x256xi32>
    %c15_i32 = arith.constant 15 : i32
    %29 = vector.broadcast %c15_i32 : i32 to vector<1x256xi32>
    %30 = arith.cmpi slt, %5, %29 : vector<1x256xi32>
    %31 = arith.andi %28, %30 : vector<1x256xi1>
    %c-2_i32 = arith.constant -2 : i32
    %32 = vector.broadcast %c-2_i32 : i32 to vector<1x256xi32>
    %33 = arith.cmpi sge, %5, %32 : vector<1x256xi32>
    %c14_i32 = arith.constant 14 : i32
    %34 = vector.broadcast %c14_i32 : i32 to vector<1x256xi32>
    %35 = arith.cmpi slt, %5, %34 : vector<1x256xi32>
    %36 = arith.andi %33, %35 : vector<1x256xi1>
    %c-3_i32 = arith.constant -3 : i32
    %37 = vector.broadcast %c-3_i32 : i32 to vector<1x256xi32>
    %38 = arith.cmpi sge, %5, %37 : vector<1x256xi32>
    %c13_i32 = arith.constant 13 : i32
    %39 = vector.broadcast %c13_i32 : i32 to vector<1x256xi32>
    %40 = arith.cmpi slt, %5, %39 : vector<1x256xi32>
    %41 = arith.andi %38, %40 : vector<1x256xi1>
    %c3_i32_7 = arith.constant 3 : i32
    %42 = vector.broadcast %c3_i32_7 : i32 to vector<1x256xi32>
    %43 = arith.cmpi sge, %6, %42 : vector<1x256xi32>
    %c19_i32_8 = arith.constant 19 : i32
    %44 = vector.broadcast %c19_i32_8 : i32 to vector<1x256xi32>
    %45 = arith.cmpi slt, %6, %44 : vector<1x256xi32>
    %46 = arith.andi %43, %45 : vector<1x256xi1>
    %c2_i32_9 = arith.constant 2 : i32
    %47 = vector.broadcast %c2_i32_9 : i32 to vector<1x256xi32>
    %48 = arith.cmpi sge, %6, %47 : vector<1x256xi32>
    %c18_i32_10 = arith.constant 18 : i32
    %49 = vector.broadcast %c18_i32_10 : i32 to vector<1x256xi32>
    %50 = arith.cmpi slt, %6, %49 : vector<1x256xi32>
    %51 = arith.andi %48, %50 : vector<1x256xi1>
    %c1_i32_11 = arith.constant 1 : i32
    %52 = vector.broadcast %c1_i32_11 : i32 to vector<1x256xi32>
    %53 = arith.cmpi sge, %6, %52 : vector<1x256xi32>
    %c17_i32_12 = arith.constant 17 : i32
    %54 = vector.broadcast %c17_i32_12 : i32 to vector<1x256xi32>
    %55 = arith.cmpi slt, %6, %54 : vector<1x256xi32>
    %56 = arith.andi %53, %55 : vector<1x256xi1>
    %c0_i32_13 = arith.constant 0 : i32
    %57 = vector.broadcast %c0_i32_13 : i32 to vector<1x256xi32>
    %58 = arith.cmpi sge, %6, %57 : vector<1x256xi32>
    %c16_i32_14 = arith.constant 16 : i32
    %59 = vector.broadcast %c16_i32_14 : i32 to vector<1x256xi32>
    %60 = arith.cmpi slt, %6, %59 : vector<1x256xi32>
    %61 = arith.andi %58, %60 : vector<1x256xi1>
    %c-1_i32_15 = arith.constant -1 : i32
    %62 = vector.broadcast %c-1_i32_15 : i32 to vector<1x256xi32>
    %63 = arith.cmpi sge, %6, %62 : vector<1x256xi32>
    %c15_i32_16 = arith.constant 15 : i32
    %64 = vector.broadcast %c15_i32_16 : i32 to vector<1x256xi32>
    %65 = arith.cmpi slt, %6, %64 : vector<1x256xi32>
    %66 = arith.andi %63, %65 : vector<1x256xi1>
    %c-2_i32_17 = arith.constant -2 : i32
    %67 = vector.broadcast %c-2_i32_17 : i32 to vector<1x256xi32>
    %68 = arith.cmpi sge, %6, %67 : vector<1x256xi32>
    %c14_i32_18 = arith.constant 14 : i32
    %69 = vector.broadcast %c14_i32_18 : i32 to vector<1x256xi32>
    %70 = arith.cmpi slt, %6, %69 : vector<1x256xi32>
    %71 = arith.andi %68, %70 : vector<1x256xi1>
    %c-3_i32_19 = arith.constant -3 : i32
    %72 = vector.broadcast %c-3_i32_19 : i32 to vector<1x256xi32>
    %73 = arith.cmpi sge, %6, %72 : vector<1x256xi32>
    %c13_i32_20 = arith.constant 13 : i32
    %74 = vector.broadcast %c13_i32_20 : i32 to vector<1x256xi32>
    %75 = arith.cmpi slt, %6, %74 : vector<1x256xi32>
    %76 = arith.andi %73, %75 : vector<1x256xi1>
    %cst_21 = arith.constant 0.000000e+00 : f32
    %77 = vector.broadcast %cst_21 : f32 to vector<1x256xf32>
    %cst_22 = arith.constant 0.000000e+00 : f32
    %78 = vector.broadcast %cst_22 : f32 to vector<1x256xf32>
    %cst_23 = arith.constant 0.000000e+00 : f32
    %79 = vector.broadcast %cst_23 : f32 to vector<1x256xf32>
    %cst_24 = arith.constant 0.000000e+00 : f32
    %80 = vector.broadcast %cst_24 : f32 to vector<1x256xf32>
    %c0_25 = arith.constant 0 : index
    %81 = memref.load %arg2[%c0_25] : memref<98xf32, #tpu.memory_space<smem>>
    %82 = vector.broadcast %81 : f32 to vector<1x256xf32>
    %83 = arith.mulf %82, %3 : vector<1x256xf32>
    %c49 = arith.constant 49 : index
    %84 = memref.load %arg2[%c49] : memref<98xf32, #tpu.memory_space<smem>>
    %85 = vector.broadcast %84 : f32 to vector<1x256xf32>
    %86 = arith.mulf %85, %4 : vector<1x256xf32>
    %87 = arith.addf %83, %86 : vector<1x256xf32>
    %c51_i32 = arith.constant 51 : i32
    %88 = tpu.dynamic_rotate %87 by %c51_i32 dim 1 : vector<1x256xf32>, i32 -> vector<1x256xf32>
    %89 = arith.andi %11, %46 : vector<1x256xi1>
    %90 = arith.extui %89 : vector<1x256xi1> to vector<1x256xi32>
    %91 = arith.sitofp %90 : vector<1x256xi32> to vector<1x256xf32>
    %92 = arith.mulf %88, %91 : vector<1x256xf32>
    %93 = arith.addf %77, %92 : vector<1x256xf32>
    %c1_26 = arith.constant 1 : index
    %94 = memref.load %arg2[%c1_26] : memref<98xf32, #tpu.memory_space<smem>>
    %95 = vector.broadcast %94 : f32 to vector<1x256xf32>
    %96 = arith.mulf %95, %3 : vector<1x256xf32>
    %c50 = arith.constant 50 : index
    %97 = memref.load %arg2[%c50] : memref<98xf32, #tpu.memory_space<smem>>
    %98 = vector.broadcast %97 : f32 to vector<1x256xf32>
    %99 = arith.mulf %98, %4 : vector<1x256xf32>
    %100 = arith.addf %96, %99 : vector<1x256xf32>
    %c50_i32 = arith.constant 50 : i32
    %101 = tpu.dynamic_rotate %100 by %c50_i32 dim 1 : vector<1x256xf32>, i32 -> vector<1x256xf32>
    %102 = arith.andi %11, %51 : vector<1x256xi1>
    %103 = arith.extui %102 : vector<1x256xi1> to vector<1x256xi32>
    %104 = arith.sitofp %103 : vector<1x256xi32> to vector<1x256xf32>
    %105 = arith.mulf %101, %104 : vector<1x256xf32>
    %106 = arith.addf %78, %105 : vector<1x256xf32>
    %c2 = arith.constant 2 : index
    %107 = memref.load %arg2[%c2] : memref<98xf32, #tpu.memory_space<smem>>
    %108 = vector.broadcast %107 : f32 to vector<1x256xf32>
    %109 = arith.mulf %108, %3 : vector<1x256xf32>
    %c51 = arith.constant 51 : index
    %110 = memref.load %arg2[%c51] : memref<98xf32, #tpu.memory_space<smem>>
    %111 = vector.broadcast %110 : f32 to vector<1x256xf32>
    %112 = arith.mulf %111, %4 : vector<1x256xf32>
    %113 = arith.addf %109, %112 : vector<1x256xf32>
    %c49_i32 = arith.constant 49 : i32
    %114 = tpu.dynamic_rotate %113 by %c49_i32 dim 1 : vector<1x256xf32>, i32 -> vector<1x256xf32>
    %115 = arith.andi %11, %56 : vector<1x256xi1>
    %116 = arith.extui %115 : vector<1x256xi1> to vector<1x256xi32>
    %117 = arith.sitofp %116 : vector<1x256xi32> to vector<1x256xf32>
    %118 = arith.mulf %114, %117 : vector<1x256xf32>
    %119 = arith.addf %79, %118 : vector<1x256xf32>
    %c3 = arith.constant 3 : index
    %120 = memref.load %arg2[%c3] : memref<98xf32, #tpu.memory_space<smem>>
    %121 = vector.broadcast %120 : f32 to vector<1x256xf32>
    %122 = arith.mulf %121, %3 : vector<1x256xf32>
    %c52 = arith.constant 52 : index
    %123 = memref.load %arg2[%c52] : memref<98xf32, #tpu.memory_space<smem>>
    %124 = vector.broadcast %123 : f32 to vector<1x256xf32>
    %125 = arith.mulf %124, %4 : vector<1x256xf32>
    %126 = arith.addf %122, %125 : vector<1x256xf32>
    %c48_i32 = arith.constant 48 : i32
    %127 = tpu.dynamic_rotate %126 by %c48_i32 dim 1 : vector<1x256xf32>, i32 -> vector<1x256xf32>
    %128 = arith.andi %11, %61 : vector<1x256xi1>
    %129 = arith.extui %128 : vector<1x256xi1> to vector<1x256xi32>
    %130 = arith.sitofp %129 : vector<1x256xi32> to vector<1x256xf32>
    %131 = arith.mulf %127, %130 : vector<1x256xf32>
    %132 = arith.addf %80, %131 : vector<1x256xf32>
    %c4 = arith.constant 4 : index
    %133 = memref.load %arg2[%c4] : memref<98xf32, #tpu.memory_space<smem>>
    %134 = vector.broadcast %133 : f32 to vector<1x256xf32>
    %135 = arith.mulf %134, %3 : vector<1x256xf32>
    %c53 = arith.constant 53 : index
    %136 = memref.load %arg2[%c53] : memref<98xf32, #tpu.memory_space<smem>>
    %137 = vector.broadcast %136 : f32 to vector<1x256xf32>
    %138 = arith.mulf %137, %4 : vector<1x256xf32>
    %139 = arith.addf %135, %138 : vector<1x256xf32>
    %c47_i32 = arith.constant 47 : i32
    %140 = tpu.dynamic_rotate %139 by %c47_i32 dim 1 : vector<1x256xf32>, i32 -> vector<1x256xf32>
    %141 = arith.andi %11, %66 : vector<1x256xi1>
    %142 = arith.extui %141 : vector<1x256xi1> to vector<1x256xi32>
    %143 = arith.sitofp %142 : vector<1x256xi32> to vector<1x256xf32>
    %144 = arith.mulf %140, %143 : vector<1x256xf32>
    %145 = arith.addf %93, %144 : vector<1x256xf32>
    %c5 = arith.constant 5 : index
    %146 = memref.load %arg2[%c5] : memref<98xf32, #tpu.memory_space<smem>>
    %147 = vector.broadcast %146 : f32 to vector<1x256xf32>
    %148 = arith.mulf %147, %3 : vector<1x256xf32>
    %c54 = arith.constant 54 : index
    %149 = memref.load %arg2[%c54] : memref<98xf32, #tpu.memory_space<smem>>
    %150 = vector.broadcast %149 : f32 to vector<1x256xf32>
    %151 = arith.mulf %150, %4 : vector<1x256xf32>
    %152 = arith.addf %148, %151 : vector<1x256xf32>
    %c46_i32 = arith.constant 46 : i32
    %153 = tpu.dynamic_rotate %152 by %c46_i32 dim 1 : vector<1x256xf32>, i32 -> vector<1x256xf32>
    %154 = arith.andi %11, %71 : vector<1x256xi1>
    %155 = arith.extui %154 : vector<1x256xi1> to vector<1x256xi32>
    %156 = arith.sitofp %155 : vector<1x256xi32> to vector<1x256xf32>
    %157 = arith.mulf %153, %156 : vector<1x256xf32>
    %158 = arith.addf %106, %157 : vector<1x256xf32>
    %c6 = arith.constant 6 : index
    %159 = memref.load %arg2[%c6] : memref<98xf32, #tpu.memory_space<smem>>
    %160 = vector.broadcast %159 : f32 to vector<1x256xf32>
    %161 = arith.mulf %160, %3 : vector<1x256xf32>
    %c55 = arith.constant 55 : index
    %162 = memref.load %arg2[%c55] : memref<98xf32, #tpu.memory_space<smem>>
    %163 = vector.broadcast %162 : f32 to vector<1x256xf32>
    %164 = arith.mulf %163, %4 : vector<1x256xf32>
    %165 = arith.addf %161, %164 : vector<1x256xf32>
    %c45_i32 = arith.constant 45 : i32
    %166 = tpu.dynamic_rotate %165 by %c45_i32 dim 1 : vector<1x256xf32>, i32 -> vector<1x256xf32>
    %167 = arith.andi %11, %76 : vector<1x256xi1>
    %168 = arith.extui %167 : vector<1x256xi1> to vector<1x256xi32>
    %169 = arith.sitofp %168 : vector<1x256xi32> to vector<1x256xf32>
    %170 = arith.mulf %166, %169 : vector<1x256xf32>
    %171 = arith.addf %119, %170 : vector<1x256xf32>
    %c7 = arith.constant 7 : index
    %172 = memref.load %arg2[%c7] : memref<98xf32, #tpu.memory_space<smem>>
    %173 = vector.broadcast %172 : f32 to vector<1x256xf32>
    %174 = arith.mulf %173, %3 : vector<1x256xf32>
    %c56 = arith.constant 56 : index
    %175 = memref.load %arg2[%c56] : memref<98xf32, #tpu.memory_space<smem>>
    %176 = vector.broadcast %175 : f32 to vector<1x256xf32>
    %177 = arith.mulf %176, %4 : vector<1x256xf32>
    %178 = arith.addf %174, %177 : vector<1x256xf32>
    %c35_i32 = arith.constant 35 : i32
    %179 = tpu.dynamic_rotate %178 by %c35_i32 dim 1 : vector<1x256xf32>, i32 -> vector<1x256xf32>
    %180 = arith.andi %16, %46 : vector<1x256xi1>
    %181 = arith.extui %180 : vector<1x256xi1> to vector<1x256xi32>
    %182 = arith.sitofp %181 : vector<1x256xi32> to vector<1x256xf32>
    %183 = arith.mulf %179, %182 : vector<1x256xf32>
    %184 = arith.addf %132, %183 : vector<1x256xf32>
    %c8 = arith.constant 8 : index
    %185 = memref.load %arg2[%c8] : memref<98xf32, #tpu.memory_space<smem>>
    %186 = vector.broadcast %185 : f32 to vector<1x256xf32>
    %187 = arith.mulf %186, %3 : vector<1x256xf32>
    %c57 = arith.constant 57 : index
    %188 = memref.load %arg2[%c57] : memref<98xf32, #tpu.memory_space<smem>>
    %189 = vector.broadcast %188 : f32 to vector<1x256xf32>
    %190 = arith.mulf %189, %4 : vector<1x256xf32>
    %191 = arith.addf %187, %190 : vector<1x256xf32>
    %c34_i32 = arith.constant 34 : i32
    %192 = tpu.dynamic_rotate %191 by %c34_i32 dim 1 : vector<1x256xf32>, i32 -> vector<1x256xf32>
    %193 = arith.andi %16, %51 : vector<1x256xi1>
    %194 = arith.extui %193 : vector<1x256xi1> to vector<1x256xi32>
    %195 = arith.sitofp %194 : vector<1x256xi32> to vector<1x256xf32>
    %196 = arith.mulf %192, %195 : vector<1x256xf32>
    %197 = arith.addf %145, %196 : vector<1x256xf32>
    %c9 = arith.constant 9 : index
    %198 = memref.load %arg2[%c9] : memref<98xf32, #tpu.memory_space<smem>>
    %199 = vector.broadcast %198 : f32 to vector<1x256xf32>
    %200 = arith.mulf %199, %3 : vector<1x256xf32>
    %c58 = arith.constant 58 : index
    %201 = memref.load %arg2[%c58] : memref<98xf32, #tpu.memory_space<smem>>
    %202 = vector.broadcast %201 : f32 to vector<1x256xf32>
    %203 = arith.mulf %202, %4 : vector<1x256xf32>
    %204 = arith.addf %200, %203 : vector<1x256xf32>
    %c33_i32 = arith.constant 33 : i32
    %205 = tpu.dynamic_rotate %204 by %c33_i32 dim 1 : vector<1x256xf32>, i32 -> vector<1x256xf32>
    %206 = arith.andi %16, %56 : vector<1x256xi1>
    %207 = arith.extui %206 : vector<1x256xi1> to vector<1x256xi32>
    %208 = arith.sitofp %207 : vector<1x256xi32> to vector<1x256xf32>
    %209 = arith.mulf %205, %208 : vector<1x256xf32>
    %210 = arith.addf %158, %209 : vector<1x256xf32>
    %c10 = arith.constant 10 : index
    %211 = memref.load %arg2[%c10] : memref<98xf32, #tpu.memory_space<smem>>
    %212 = vector.broadcast %211 : f32 to vector<1x256xf32>
    %213 = arith.mulf %212, %3 : vector<1x256xf32>
    %c59 = arith.constant 59 : index
    %214 = memref.load %arg2[%c59] : memref<98xf32, #tpu.memory_space<smem>>
    %215 = vector.broadcast %214 : f32 to vector<1x256xf32>
    %216 = arith.mulf %215, %4 : vector<1x256xf32>
    %217 = arith.addf %213, %216 : vector<1x256xf32>
    %c32_i32 = arith.constant 32 : i32
    %218 = tpu.dynamic_rotate %217 by %c32_i32 dim 1 : vector<1x256xf32>, i32 -> vector<1x256xf32>
    %219 = arith.andi %16, %61 : vector<1x256xi1>
    %220 = arith.extui %219 : vector<1x256xi1> to vector<1x256xi32>
    %221 = arith.sitofp %220 : vector<1x256xi32> to vector<1x256xf32>
    %222 = arith.mulf %218, %221 : vector<1x256xf32>
    %223 = arith.addf %171, %222 : vector<1x256xf32>
    %c11 = arith.constant 11 : index
    %224 = memref.load %arg2[%c11] : memref<98xf32, #tpu.memory_space<smem>>
    %225 = vector.broadcast %224 : f32 to vector<1x256xf32>
    %226 = arith.mulf %225, %3 : vector<1x256xf32>
    %c60 = arith.constant 60 : index
    %227 = memref.load %arg2[%c60] : memref<98xf32, #tpu.memory_space<smem>>
    %228 = vector.broadcast %227 : f32 to vector<1x256xf32>
    %229 = arith.mulf %228, %4 : vector<1x256xf32>
    %230 = arith.addf %226, %229 : vector<1x256xf32>
    %c31_i32 = arith.constant 31 : i32
    %231 = tpu.dynamic_rotate %230 by %c31_i32 dim 1 : vector<1x256xf32>, i32 -> vector<1x256xf32>
    %232 = arith.andi %16, %66 : vector<1x256xi1>
    %233 = arith.extui %232 : vector<1x256xi1> to vector<1x256xi32>
    %234 = arith.sitofp %233 : vector<1x256xi32> to vector<1x256xf32>
    %235 = arith.mulf %231, %234 : vector<1x256xf32>
    %236 = arith.addf %184, %235 : vector<1x256xf32>
    %c12 = arith.constant 12 : index
    %237 = memref.load %arg2[%c12] : memref<98xf32, #tpu.memory_space<smem>>
    %238 = vector.broadcast %237 : f32 to vector<1x256xf32>
    %239 = arith.mulf %238, %3 : vector<1x256xf32>
    %c61 = arith.constant 61 : index
    %240 = memref.load %arg2[%c61] : memref<98xf32, #tpu.memory_space<smem>>
    %241 = vector.broadcast %240 : f32 to vector<1x256xf32>
    %242 = arith.mulf %241, %4 : vector<1x256xf32>
    %243 = arith.addf %239, %242 : vector<1x256xf32>
    %c30_i32 = arith.constant 30 : i32
    %244 = tpu.dynamic_rotate %243 by %c30_i32 dim 1 : vector<1x256xf32>, i32 -> vector<1x256xf32>
    %245 = arith.andi %16, %71 : vector<1x256xi1>
    %246 = arith.extui %245 : vector<1x256xi1> to vector<1x256xi32>
    %247 = arith.sitofp %246 : vector<1x256xi32> to vector<1x256xf32>
    %248 = arith.mulf %244, %247 : vector<1x256xf32>
    %249 = arith.addf %197, %248 : vector<1x256xf32>
    %c13 = arith.constant 13 : index
    %250 = memref.load %arg2[%c13] : memref<98xf32, #tpu.memory_space<smem>>
    %251 = vector.broadcast %250 : f32 to vector<1x256xf32>
    %252 = arith.mulf %251, %3 : vector<1x256xf32>
    %c62 = arith.constant 62 : index
    %253 = memref.load %arg2[%c62] : memref<98xf32, #tpu.memory_space<smem>>
    %254 = vector.broadcast %253 : f32 to vector<1x256xf32>
    %255 = arith.mulf %254, %4 : vector<1x256xf32>
    %256 = arith.addf %252, %255 : vector<1x256xf32>
    %c29_i32 = arith.constant 29 : i32
    %257 = tpu.dynamic_rotate %256 by %c29_i32 dim 1 : vector<1x256xf32>, i32 -> vector<1x256xf32>
    %258 = arith.andi %16, %76 : vector<1x256xi1>
    %259 = arith.extui %258 : vector<1x256xi1> to vector<1x256xi32>
    %260 = arith.sitofp %259 : vector<1x256xi32> to vector<1x256xf32>
    %261 = arith.mulf %257, %260 : vector<1x256xf32>
    %262 = arith.addf %210, %261 : vector<1x256xf32>
    %c14 = arith.constant 14 : index
    %263 = memref.load %arg2[%c14] : memref<98xf32, #tpu.memory_space<smem>>
    %264 = vector.broadcast %263 : f32 to vector<1x256xf32>
    %265 = arith.mulf %264, %3 : vector<1x256xf32>
    %c63 = arith.constant 63 : index
    %266 = memref.load %arg2[%c63] : memref<98xf32, #tpu.memory_space<smem>>
    %267 = vector.broadcast %266 : f32 to vector<1x256xf32>
    %268 = arith.mulf %267, %4 : vector<1x256xf32>
    %269 = arith.addf %265, %268 : vector<1x256xf32>
    %c19_i32_27 = arith.constant 19 : i32
    %270 = tpu.dynamic_rotate %269 by %c19_i32_27 dim 1 : vector<1x256xf32>, i32 -> vector<1x256xf32>
    %271 = arith.andi %21, %46 : vector<1x256xi1>
    %272 = arith.extui %271 : vector<1x256xi1> to vector<1x256xi32>
    %273 = arith.sitofp %272 : vector<1x256xi32> to vector<1x256xf32>
    %274 = arith.mulf %270, %273 : vector<1x256xf32>
    %275 = arith.addf %223, %274 : vector<1x256xf32>
    %c15 = arith.constant 15 : index
    %276 = memref.load %arg2[%c15] : memref<98xf32, #tpu.memory_space<smem>>
    %277 = vector.broadcast %276 : f32 to vector<1x256xf32>
    %278 = arith.mulf %277, %3 : vector<1x256xf32>
    %c64 = arith.constant 64 : index
    %279 = memref.load %arg2[%c64] : memref<98xf32, #tpu.memory_space<smem>>
    %280 = vector.broadcast %279 : f32 to vector<1x256xf32>
    %281 = arith.mulf %280, %4 : vector<1x256xf32>
    %282 = arith.addf %278, %281 : vector<1x256xf32>
    %c18_i32_28 = arith.constant 18 : i32
    %283 = tpu.dynamic_rotate %282 by %c18_i32_28 dim 1 : vector<1x256xf32>, i32 -> vector<1x256xf32>
    %284 = arith.andi %21, %51 : vector<1x256xi1>
    %285 = arith.extui %284 : vector<1x256xi1> to vector<1x256xi32>
    %286 = arith.sitofp %285 : vector<1x256xi32> to vector<1x256xf32>
    %287 = arith.mulf %283, %286 : vector<1x256xf32>
    %288 = arith.addf %236, %287 : vector<1x256xf32>
    %c16 = arith.constant 16 : index
    %289 = memref.load %arg2[%c16] : memref<98xf32, #tpu.memory_space<smem>>
    %290 = vector.broadcast %289 : f32 to vector<1x256xf32>
    %291 = arith.mulf %290, %3 : vector<1x256xf32>
    %c65 = arith.constant 65 : index
    %292 = memref.load %arg2[%c65] : memref<98xf32, #tpu.memory_space<smem>>
    %293 = vector.broadcast %292 : f32 to vector<1x256xf32>
    %294 = arith.mulf %293, %4 : vector<1x256xf32>
    %295 = arith.addf %291, %294 : vector<1x256xf32>
    %c17_i32_29 = arith.constant 17 : i32
    %296 = tpu.dynamic_rotate %295 by %c17_i32_29 dim 1 : vector<1x256xf32>, i32 -> vector<1x256xf32>
    %297 = arith.andi %21, %56 : vector<1x256xi1>
    %298 = arith.extui %297 : vector<1x256xi1> to vector<1x256xi32>
    %299 = arith.sitofp %298 : vector<1x256xi32> to vector<1x256xf32>
    %300 = arith.mulf %296, %299 : vector<1x256xf32>
    %301 = arith.addf %249, %300 : vector<1x256xf32>
    %c17 = arith.constant 17 : index
    %302 = memref.load %arg2[%c17] : memref<98xf32, #tpu.memory_space<smem>>
    %303 = vector.broadcast %302 : f32 to vector<1x256xf32>
    %304 = arith.mulf %303, %3 : vector<1x256xf32>
    %c66 = arith.constant 66 : index
    %305 = memref.load %arg2[%c66] : memref<98xf32, #tpu.memory_space<smem>>
    %306 = vector.broadcast %305 : f32 to vector<1x256xf32>
    %307 = arith.mulf %306, %4 : vector<1x256xf32>
    %308 = arith.addf %304, %307 : vector<1x256xf32>
    %c16_i32_30 = arith.constant 16 : i32
    %309 = tpu.dynamic_rotate %308 by %c16_i32_30 dim 1 : vector<1x256xf32>, i32 -> vector<1x256xf32>
    %310 = arith.andi %21, %61 : vector<1x256xi1>
    %311 = arith.extui %310 : vector<1x256xi1> to vector<1x256xi32>
    %312 = arith.sitofp %311 : vector<1x256xi32> to vector<1x256xf32>
    %313 = arith.mulf %309, %312 : vector<1x256xf32>
    %314 = arith.addf %262, %313 : vector<1x256xf32>
    %c18 = arith.constant 18 : index
    %315 = memref.load %arg2[%c18] : memref<98xf32, #tpu.memory_space<smem>>
    %316 = vector.broadcast %315 : f32 to vector<1x256xf32>
    %317 = arith.mulf %316, %3 : vector<1x256xf32>
    %c67 = arith.constant 67 : index
    %318 = memref.load %arg2[%c67] : memref<98xf32, #tpu.memory_space<smem>>
    %319 = vector.broadcast %318 : f32 to vector<1x256xf32>
    %320 = arith.mulf %319, %4 : vector<1x256xf32>
    %321 = arith.addf %317, %320 : vector<1x256xf32>
    %c15_i32_31 = arith.constant 15 : i32
    %322 = tpu.dynamic_rotate %321 by %c15_i32_31 dim 1 : vector<1x256xf32>, i32 -> vector<1x256xf32>
    %323 = arith.andi %21, %66 : vector<1x256xi1>
    %324 = arith.extui %323 : vector<1x256xi1> to vector<1x256xi32>
    %325 = arith.sitofp %324 : vector<1x256xi32> to vector<1x256xf32>
    %326 = arith.mulf %322, %325 : vector<1x256xf32>
    %327 = arith.addf %275, %326 : vector<1x256xf32>
    %c19 = arith.constant 19 : index
    %328 = memref.load %arg2[%c19] : memref<98xf32, #tpu.memory_space<smem>>
    %329 = vector.broadcast %328 : f32 to vector<1x256xf32>
    %330 = arith.mulf %329, %3 : vector<1x256xf32>
    %c68 = arith.constant 68 : index
    %331 = memref.load %arg2[%c68] : memref<98xf32, #tpu.memory_space<smem>>
    %332 = vector.broadcast %331 : f32 to vector<1x256xf32>
    %333 = arith.mulf %332, %4 : vector<1x256xf32>
    %334 = arith.addf %330, %333 : vector<1x256xf32>
    %c14_i32_32 = arith.constant 14 : i32
    %335 = tpu.dynamic_rotate %334 by %c14_i32_32 dim 1 : vector<1x256xf32>, i32 -> vector<1x256xf32>
    %336 = arith.andi %21, %71 : vector<1x256xi1>
    %337 = arith.extui %336 : vector<1x256xi1> to vector<1x256xi32>
    %338 = arith.sitofp %337 : vector<1x256xi32> to vector<1x256xf32>
    %339 = arith.mulf %335, %338 : vector<1x256xf32>
    %340 = arith.addf %288, %339 : vector<1x256xf32>
    %c20 = arith.constant 20 : index
    %341 = memref.load %arg2[%c20] : memref<98xf32, #tpu.memory_space<smem>>
    %342 = vector.broadcast %341 : f32 to vector<1x256xf32>
    %343 = arith.mulf %342, %3 : vector<1x256xf32>
    %c69 = arith.constant 69 : index
    %344 = memref.load %arg2[%c69] : memref<98xf32, #tpu.memory_space<smem>>
    %345 = vector.broadcast %344 : f32 to vector<1x256xf32>
    %346 = arith.mulf %345, %4 : vector<1x256xf32>
    %347 = arith.addf %343, %346 : vector<1x256xf32>
    %c13_i32_33 = arith.constant 13 : i32
    %348 = tpu.dynamic_rotate %347 by %c13_i32_33 dim 1 : vector<1x256xf32>, i32 -> vector<1x256xf32>
    %349 = arith.andi %21, %76 : vector<1x256xi1>
    %350 = arith.extui %349 : vector<1x256xi1> to vector<1x256xi32>
    %351 = arith.sitofp %350 : vector<1x256xi32> to vector<1x256xf32>
    %352 = arith.mulf %348, %351 : vector<1x256xf32>
    %353 = arith.addf %301, %352 : vector<1x256xf32>
    %c21 = arith.constant 21 : index
    %354 = memref.load %arg2[%c21] : memref<98xf32, #tpu.memory_space<smem>>
    %355 = vector.broadcast %354 : f32 to vector<1x256xf32>
    %356 = arith.mulf %355, %3 : vector<1x256xf32>
    %c70 = arith.constant 70 : index
    %357 = memref.load %arg2[%c70] : memref<98xf32, #tpu.memory_space<smem>>
    %358 = vector.broadcast %357 : f32 to vector<1x256xf32>
    %359 = arith.mulf %358, %4 : vector<1x256xf32>
    %360 = arith.addf %356, %359 : vector<1x256xf32>
    %c3_i32_34 = arith.constant 3 : i32
    %361 = tpu.dynamic_rotate %360 by %c3_i32_34 dim 1 : vector<1x256xf32>, i32 -> vector<1x256xf32>
    %362 = arith.andi %26, %46 : vector<1x256xi1>
    %363 = arith.extui %362 : vector<1x256xi1> to vector<1x256xi32>
    %364 = arith.sitofp %363 : vector<1x256xi32> to vector<1x256xf32>
    %365 = arith.mulf %361, %364 : vector<1x256xf32>
    %366 = arith.addf %314, %365 : vector<1x256xf32>
    %c22 = arith.constant 22 : index
    %367 = memref.load %arg2[%c22] : memref<98xf32, #tpu.memory_space<smem>>
    %368 = vector.broadcast %367 : f32 to vector<1x256xf32>
    %369 = arith.mulf %368, %3 : vector<1x256xf32>
    %c71 = arith.constant 71 : index
    %370 = memref.load %arg2[%c71] : memref<98xf32, #tpu.memory_space<smem>>
    %371 = vector.broadcast %370 : f32 to vector<1x256xf32>
    %372 = arith.mulf %371, %4 : vector<1x256xf32>
    %373 = arith.addf %369, %372 : vector<1x256xf32>
    %c2_i32_35 = arith.constant 2 : i32
    %374 = tpu.dynamic_rotate %373 by %c2_i32_35 dim 1 : vector<1x256xf32>, i32 -> vector<1x256xf32>
    %375 = arith.andi %26, %51 : vector<1x256xi1>
    %376 = arith.extui %375 : vector<1x256xi1> to vector<1x256xi32>
    %377 = arith.sitofp %376 : vector<1x256xi32> to vector<1x256xf32>
    %378 = arith.mulf %374, %377 : vector<1x256xf32>
    %379 = arith.addf %327, %378 : vector<1x256xf32>
    %c23 = arith.constant 23 : index
    %380 = memref.load %arg2[%c23] : memref<98xf32, #tpu.memory_space<smem>>
    %381 = vector.broadcast %380 : f32 to vector<1x256xf32>
    %382 = arith.mulf %381, %3 : vector<1x256xf32>
    %c72 = arith.constant 72 : index
    %383 = memref.load %arg2[%c72] : memref<98xf32, #tpu.memory_space<smem>>
    %384 = vector.broadcast %383 : f32 to vector<1x256xf32>
    %385 = arith.mulf %384, %4 : vector<1x256xf32>
    %386 = arith.addf %382, %385 : vector<1x256xf32>
    %c1_i32_36 = arith.constant 1 : i32
    %387 = tpu.dynamic_rotate %386 by %c1_i32_36 dim 1 : vector<1x256xf32>, i32 -> vector<1x256xf32>
    %388 = arith.andi %26, %56 : vector<1x256xi1>
    %389 = arith.extui %388 : vector<1x256xi1> to vector<1x256xi32>
    %390 = arith.sitofp %389 : vector<1x256xi32> to vector<1x256xf32>
    %391 = arith.mulf %387, %390 : vector<1x256xf32>
    %392 = arith.addf %340, %391 : vector<1x256xf32>
    %c24 = arith.constant 24 : index
    %393 = memref.load %arg2[%c24] : memref<98xf32, #tpu.memory_space<smem>>
    %394 = vector.broadcast %393 : f32 to vector<1x256xf32>
    %395 = arith.mulf %394, %3 : vector<1x256xf32>
    %c73 = arith.constant 73 : index
    %396 = memref.load %arg2[%c73] : memref<98xf32, #tpu.memory_space<smem>>
    %397 = vector.broadcast %396 : f32 to vector<1x256xf32>
    %398 = arith.mulf %397, %4 : vector<1x256xf32>
    %399 = arith.addf %395, %398 : vector<1x256xf32>
    %400 = arith.andi %26, %61 : vector<1x256xi1>
    %401 = arith.extui %400 : vector<1x256xi1> to vector<1x256xi32>
    %402 = arith.sitofp %401 : vector<1x256xi32> to vector<1x256xf32>
    %403 = arith.mulf %399, %402 : vector<1x256xf32>
    %404 = arith.addf %353, %403 : vector<1x256xf32>
    %c25 = arith.constant 25 : index
    %405 = memref.load %arg2[%c25] : memref<98xf32, #tpu.memory_space<smem>>
    %406 = vector.broadcast %405 : f32 to vector<1x256xf32>
    %407 = arith.mulf %406, %3 : vector<1x256xf32>
    %c74 = arith.constant 74 : index
    %408 = memref.load %arg2[%c74] : memref<98xf32, #tpu.memory_space<smem>>
    %409 = vector.broadcast %408 : f32 to vector<1x256xf32>
    %410 = arith.mulf %409, %4 : vector<1x256xf32>
    %411 = arith.addf %407, %410 : vector<1x256xf32>
    %c255_i32 = arith.constant 255 : i32
    %412 = tpu.dynamic_rotate %411 by %c255_i32 dim 1 : vector<1x256xf32>, i32 -> vector<1x256xf32>
    %413 = arith.andi %26, %66 : vector<1x256xi1>
    %414 = arith.extui %413 : vector<1x256xi1> to vector<1x256xi32>
    %415 = arith.sitofp %414 : vector<1x256xi32> to vector<1x256xf32>
    %416 = arith.mulf %412, %415 : vector<1x256xf32>
    %417 = arith.addf %366, %416 : vector<1x256xf32>
    %c26 = arith.constant 26 : index
    %418 = memref.load %arg2[%c26] : memref<98xf32, #tpu.memory_space<smem>>
    %419 = vector.broadcast %418 : f32 to vector<1x256xf32>
    %420 = arith.mulf %419, %3 : vector<1x256xf32>
    %c75 = arith.constant 75 : index
    %421 = memref.load %arg2[%c75] : memref<98xf32, #tpu.memory_space<smem>>
    %422 = vector.broadcast %421 : f32 to vector<1x256xf32>
    %423 = arith.mulf %422, %4 : vector<1x256xf32>
    %424 = arith.addf %420, %423 : vector<1x256xf32>
    %c254_i32 = arith.constant 254 : i32
    %425 = tpu.dynamic_rotate %424 by %c254_i32 dim 1 : vector<1x256xf32>, i32 -> vector<1x256xf32>
    %426 = arith.andi %26, %71 : vector<1x256xi1>
    %427 = arith.extui %426 : vector<1x256xi1> to vector<1x256xi32>
    %428 = arith.sitofp %427 : vector<1x256xi32> to vector<1x256xf32>
    %429 = arith.mulf %425, %428 : vector<1x256xf32>
    %430 = arith.addf %379, %429 : vector<1x256xf32>
    %c27 = arith.constant 27 : index
    %431 = memref.load %arg2[%c27] : memref<98xf32, #tpu.memory_space<smem>>
    %432 = vector.broadcast %431 : f32 to vector<1x256xf32>
    %433 = arith.mulf %432, %3 : vector<1x256xf32>
    %c76 = arith.constant 76 : index
    %434 = memref.load %arg2[%c76] : memref<98xf32, #tpu.memory_space<smem>>
    %435 = vector.broadcast %434 : f32 to vector<1x256xf32>
    %436 = arith.mulf %435, %4 : vector<1x256xf32>
    %437 = arith.addf %433, %436 : vector<1x256xf32>
    %c253_i32 = arith.constant 253 : i32
    %438 = tpu.dynamic_rotate %437 by %c253_i32 dim 1 : vector<1x256xf32>, i32 -> vector<1x256xf32>
    %439 = arith.andi %26, %76 : vector<1x256xi1>
    %440 = arith.extui %439 : vector<1x256xi1> to vector<1x256xi32>
    %441 = arith.sitofp %440 : vector<1x256xi32> to vector<1x256xf32>
    %442 = arith.mulf %438, %441 : vector<1x256xf32>
    %443 = arith.addf %392, %442 : vector<1x256xf32>
    %c28 = arith.constant 28 : index
    %444 = memref.load %arg2[%c28] : memref<98xf32, #tpu.memory_space<smem>>
    %445 = vector.broadcast %444 : f32 to vector<1x256xf32>
    %446 = arith.mulf %445, %3 : vector<1x256xf32>
    %c77 = arith.constant 77 : index
    %447 = memref.load %arg2[%c77] : memref<98xf32, #tpu.memory_space<smem>>
    %448 = vector.broadcast %447 : f32 to vector<1x256xf32>
    %449 = arith.mulf %448, %4 : vector<1x256xf32>
    %450 = arith.addf %446, %449 : vector<1x256xf32>
    %c243_i32 = arith.constant 243 : i32
    %451 = tpu.dynamic_rotate %450 by %c243_i32 dim 1 : vector<1x256xf32>, i32 -> vector<1x256xf32>
    %452 = arith.andi %31, %46 : vector<1x256xi1>
    %453 = arith.extui %452 : vector<1x256xi1> to vector<1x256xi32>
    %454 = arith.sitofp %453 : vector<1x256xi32> to vector<1x256xf32>
    %455 = arith.mulf %451, %454 : vector<1x256xf32>
    %456 = arith.addf %404, %455 : vector<1x256xf32>
    %c29 = arith.constant 29 : index
    %457 = memref.load %arg2[%c29] : memref<98xf32, #tpu.memory_space<smem>>
    %458 = vector.broadcast %457 : f32 to vector<1x256xf32>
    %459 = arith.mulf %458, %3 : vector<1x256xf32>
    %c78 = arith.constant 78 : index
    %460 = memref.load %arg2[%c78] : memref<98xf32, #tpu.memory_space<smem>>
    %461 = vector.broadcast %460 : f32 to vector<1x256xf32>
    %462 = arith.mulf %461, %4 : vector<1x256xf32>
    %463 = arith.addf %459, %462 : vector<1x256xf32>
    %c242_i32 = arith.constant 242 : i32
    %464 = tpu.dynamic_rotate %463 by %c242_i32 dim 1 : vector<1x256xf32>, i32 -> vector<1x256xf32>
    %465 = arith.andi %31, %51 : vector<1x256xi1>
    %466 = arith.extui %465 : vector<1x256xi1> to vector<1x256xi32>
    %467 = arith.sitofp %466 : vector<1x256xi32> to vector<1x256xf32>
    %468 = arith.mulf %464, %467 : vector<1x256xf32>
    %469 = arith.addf %417, %468 : vector<1x256xf32>
    %c30 = arith.constant 30 : index
    %470 = memref.load %arg2[%c30] : memref<98xf32, #tpu.memory_space<smem>>
    %471 = vector.broadcast %470 : f32 to vector<1x256xf32>
    %472 = arith.mulf %471, %3 : vector<1x256xf32>
    %c79 = arith.constant 79 : index
    %473 = memref.load %arg2[%c79] : memref<98xf32, #tpu.memory_space<smem>>
    %474 = vector.broadcast %473 : f32 to vector<1x256xf32>
    %475 = arith.mulf %474, %4 : vector<1x256xf32>
    %476 = arith.addf %472, %475 : vector<1x256xf32>
    %c241_i32 = arith.constant 241 : i32
    %477 = tpu.dynamic_rotate %476 by %c241_i32 dim 1 : vector<1x256xf32>, i32 -> vector<1x256xf32>
    %478 = arith.andi %31, %56 : vector<1x256xi1>
    %479 = arith.extui %478 : vector<1x256xi1> to vector<1x256xi32>
    %480 = arith.sitofp %479 : vector<1x256xi32> to vector<1x256xf32>
    %481 = arith.mulf %477, %480 : vector<1x256xf32>
    %482 = arith.addf %430, %481 : vector<1x256xf32>
    %c31 = arith.constant 31 : index
    %483 = memref.load %arg2[%c31] : memref<98xf32, #tpu.memory_space<smem>>
    %484 = vector.broadcast %483 : f32 to vector<1x256xf32>
    %485 = arith.mulf %484, %3 : vector<1x256xf32>
    %c80 = arith.constant 80 : index
    %486 = memref.load %arg2[%c80] : memref<98xf32, #tpu.memory_space<smem>>
    %487 = vector.broadcast %486 : f32 to vector<1x256xf32>
    %488 = arith.mulf %487, %4 : vector<1x256xf32>
    %489 = arith.addf %485, %488 : vector<1x256xf32>
    %c240_i32 = arith.constant 240 : i32
    %490 = tpu.dynamic_rotate %489 by %c240_i32 dim 1 : vector<1x256xf32>, i32 -> vector<1x256xf32>
    %491 = arith.andi %31, %61 : vector<1x256xi1>
    %492 = arith.extui %491 : vector<1x256xi1> to vector<1x256xi32>
    %493 = arith.sitofp %492 : vector<1x256xi32> to vector<1x256xf32>
    %494 = arith.mulf %490, %493 : vector<1x256xf32>
    %495 = arith.addf %443, %494 : vector<1x256xf32>
    %c32 = arith.constant 32 : index
    %496 = memref.load %arg2[%c32] : memref<98xf32, #tpu.memory_space<smem>>
    %497 = vector.broadcast %496 : f32 to vector<1x256xf32>
    %498 = arith.mulf %497, %3 : vector<1x256xf32>
    %c81 = arith.constant 81 : index
    %499 = memref.load %arg2[%c81] : memref<98xf32, #tpu.memory_space<smem>>
    %500 = vector.broadcast %499 : f32 to vector<1x256xf32>
    %501 = arith.mulf %500, %4 : vector<1x256xf32>
    %502 = arith.addf %498, %501 : vector<1x256xf32>
    %c239_i32 = arith.constant 239 : i32
    %503 = tpu.dynamic_rotate %502 by %c239_i32 dim 1 : vector<1x256xf32>, i32 -> vector<1x256xf32>
    %504 = arith.andi %31, %66 : vector<1x256xi1>
    %505 = arith.extui %504 : vector<1x256xi1> to vector<1x256xi32>
    %506 = arith.sitofp %505 : vector<1x256xi32> to vector<1x256xf32>
    %507 = arith.mulf %503, %506 : vector<1x256xf32>
    %508 = arith.addf %456, %507 : vector<1x256xf32>
    %c33 = arith.constant 33 : index
    %509 = memref.load %arg2[%c33] : memref<98xf32, #tpu.memory_space<smem>>
    %510 = vector.broadcast %509 : f32 to vector<1x256xf32>
    %511 = arith.mulf %510, %3 : vector<1x256xf32>
    %c82 = arith.constant 82 : index
    %512 = memref.load %arg2[%c82] : memref<98xf32, #tpu.memory_space<smem>>
    %513 = vector.broadcast %512 : f32 to vector<1x256xf32>
    %514 = arith.mulf %513, %4 : vector<1x256xf32>
    %515 = arith.addf %511, %514 : vector<1x256xf32>
    %c238_i32 = arith.constant 238 : i32
    %516 = tpu.dynamic_rotate %515 by %c238_i32 dim 1 : vector<1x256xf32>, i32 -> vector<1x256xf32>
    %517 = arith.andi %31, %71 : vector<1x256xi1>
    %518 = arith.extui %517 : vector<1x256xi1> to vector<1x256xi32>
    %519 = arith.sitofp %518 : vector<1x256xi32> to vector<1x256xf32>
    %520 = arith.mulf %516, %519 : vector<1x256xf32>
    %521 = arith.addf %469, %520 : vector<1x256xf32>
    %c34 = arith.constant 34 : index
    %522 = memref.load %arg2[%c34] : memref<98xf32, #tpu.memory_space<smem>>
    %523 = vector.broadcast %522 : f32 to vector<1x256xf32>
    %524 = arith.mulf %523, %3 : vector<1x256xf32>
    %c83 = arith.constant 83 : index
    %525 = memref.load %arg2[%c83] : memref<98xf32, #tpu.memory_space<smem>>
    %526 = vector.broadcast %525 : f32 to vector<1x256xf32>
    %527 = arith.mulf %526, %4 : vector<1x256xf32>
    %528 = arith.addf %524, %527 : vector<1x256xf32>
    %c237_i32 = arith.constant 237 : i32
    %529 = tpu.dynamic_rotate %528 by %c237_i32 dim 1 : vector<1x256xf32>, i32 -> vector<1x256xf32>
    %530 = arith.andi %31, %76 : vector<1x256xi1>
    %531 = arith.extui %530 : vector<1x256xi1> to vector<1x256xi32>
    %532 = arith.sitofp %531 : vector<1x256xi32> to vector<1x256xf32>
    %533 = arith.mulf %529, %532 : vector<1x256xf32>
    %534 = arith.addf %482, %533 : vector<1x256xf32>
    %c35 = arith.constant 35 : index
    %535 = memref.load %arg2[%c35] : memref<98xf32, #tpu.memory_space<smem>>
    %536 = vector.broadcast %535 : f32 to vector<1x256xf32>
    %537 = arith.mulf %536, %3 : vector<1x256xf32>
    %c84 = arith.constant 84 : index
    %538 = memref.load %arg2[%c84] : memref<98xf32, #tpu.memory_space<smem>>
    %539 = vector.broadcast %538 : f32 to vector<1x256xf32>
    %540 = arith.mulf %539, %4 : vector<1x256xf32>
    %541 = arith.addf %537, %540 : vector<1x256xf32>
    %c227_i32 = arith.constant 227 : i32
    %542 = tpu.dynamic_rotate %541 by %c227_i32 dim 1 : vector<1x256xf32>, i32 -> vector<1x256xf32>
    %543 = arith.andi %36, %46 : vector<1x256xi1>
    %544 = arith.extui %543 : vector<1x256xi1> to vector<1x256xi32>
    %545 = arith.sitofp %544 : vector<1x256xi32> to vector<1x256xf32>
    %546 = arith.mulf %542, %545 : vector<1x256xf32>
    %547 = arith.addf %495, %546 : vector<1x256xf32>
    %c36 = arith.constant 36 : index
    %548 = memref.load %arg2[%c36] : memref<98xf32, #tpu.memory_space<smem>>
    %549 = vector.broadcast %548 : f32 to vector<1x256xf32>
    %550 = arith.mulf %549, %3 : vector<1x256xf32>
    %c85 = arith.constant 85 : index
    %551 = memref.load %arg2[%c85] : memref<98xf32, #tpu.memory_space<smem>>
    %552 = vector.broadcast %551 : f32 to vector<1x256xf32>
    %553 = arith.mulf %552, %4 : vector<1x256xf32>
    %554 = arith.addf %550, %553 : vector<1x256xf32>
    %c226_i32 = arith.constant 226 : i32
    %555 = tpu.dynamic_rotate %554 by %c226_i32 dim 1 : vector<1x256xf32>, i32 -> vector<1x256xf32>
    %556 = arith.andi %36, %51 : vector<1x256xi1>
    %557 = arith.extui %556 : vector<1x256xi1> to vector<1x256xi32>
    %558 = arith.sitofp %557 : vector<1x256xi32> to vector<1x256xf32>
    %559 = arith.mulf %555, %558 : vector<1x256xf32>
    %560 = arith.addf %508, %559 : vector<1x256xf32>
    %c37 = arith.constant 37 : index
    %561 = memref.load %arg2[%c37] : memref<98xf32, #tpu.memory_space<smem>>
    %562 = vector.broadcast %561 : f32 to vector<1x256xf32>
    %563 = arith.mulf %562, %3 : vector<1x256xf32>
    %c86 = arith.constant 86 : index
    %564 = memref.load %arg2[%c86] : memref<98xf32, #tpu.memory_space<smem>>
    %565 = vector.broadcast %564 : f32 to vector<1x256xf32>
    %566 = arith.mulf %565, %4 : vector<1x256xf32>
    %567 = arith.addf %563, %566 : vector<1x256xf32>
    %c225_i32 = arith.constant 225 : i32
    %568 = tpu.dynamic_rotate %567 by %c225_i32 dim 1 : vector<1x256xf32>, i32 -> vector<1x256xf32>
    %569 = arith.andi %36, %56 : vector<1x256xi1>
    %570 = arith.extui %569 : vector<1x256xi1> to vector<1x256xi32>
    %571 = arith.sitofp %570 : vector<1x256xi32> to vector<1x256xf32>
    %572 = arith.mulf %568, %571 : vector<1x256xf32>
    %573 = arith.addf %521, %572 : vector<1x256xf32>
    %c38 = arith.constant 38 : index
    %574 = memref.load %arg2[%c38] : memref<98xf32, #tpu.memory_space<smem>>
    %575 = vector.broadcast %574 : f32 to vector<1x256xf32>
    %576 = arith.mulf %575, %3 : vector<1x256xf32>
    %c87 = arith.constant 87 : index
    %577 = memref.load %arg2[%c87] : memref<98xf32, #tpu.memory_space<smem>>
    %578 = vector.broadcast %577 : f32 to vector<1x256xf32>
    %579 = arith.mulf %578, %4 : vector<1x256xf32>
    %580 = arith.addf %576, %579 : vector<1x256xf32>
    %c224_i32 = arith.constant 224 : i32
    %581 = tpu.dynamic_rotate %580 by %c224_i32 dim 1 : vector<1x256xf32>, i32 -> vector<1x256xf32>
    %582 = arith.andi %36, %61 : vector<1x256xi1>
    %583 = arith.extui %582 : vector<1x256xi1> to vector<1x256xi32>
    %584 = arith.sitofp %583 : vector<1x256xi32> to vector<1x256xf32>
    %585 = arith.mulf %581, %584 : vector<1x256xf32>
    %586 = arith.addf %534, %585 : vector<1x256xf32>
    %c39 = arith.constant 39 : index
    %587 = memref.load %arg2[%c39] : memref<98xf32, #tpu.memory_space<smem>>
    %588 = vector.broadcast %587 : f32 to vector<1x256xf32>
    %589 = arith.mulf %588, %3 : vector<1x256xf32>
    %c88 = arith.constant 88 : index
    %590 = memref.load %arg2[%c88] : memref<98xf32, #tpu.memory_space<smem>>
    %591 = vector.broadcast %590 : f32 to vector<1x256xf32>
    %592 = arith.mulf %591, %4 : vector<1x256xf32>
    %593 = arith.addf %589, %592 : vector<1x256xf32>
    %c223_i32 = arith.constant 223 : i32
    %594 = tpu.dynamic_rotate %593 by %c223_i32 dim 1 : vector<1x256xf32>, i32 -> vector<1x256xf32>
    %595 = arith.andi %36, %66 : vector<1x256xi1>
    %596 = arith.extui %595 : vector<1x256xi1> to vector<1x256xi32>
    %597 = arith.sitofp %596 : vector<1x256xi32> to vector<1x256xf32>
    %598 = arith.mulf %594, %597 : vector<1x256xf32>
    %599 = arith.addf %547, %598 : vector<1x256xf32>
    %c40 = arith.constant 40 : index
    %600 = memref.load %arg2[%c40] : memref<98xf32, #tpu.memory_space<smem>>
    %601 = vector.broadcast %600 : f32 to vector<1x256xf32>
    %602 = arith.mulf %601, %3 : vector<1x256xf32>
    %c89 = arith.constant 89 : index
    %603 = memref.load %arg2[%c89] : memref<98xf32, #tpu.memory_space<smem>>
    %604 = vector.broadcast %603 : f32 to vector<1x256xf32>
    %605 = arith.mulf %604, %4 : vector<1x256xf32>
    %606 = arith.addf %602, %605 : vector<1x256xf32>
    %c222_i32 = arith.constant 222 : i32
    %607 = tpu.dynamic_rotate %606 by %c222_i32 dim 1 : vector<1x256xf32>, i32 -> vector<1x256xf32>
    %608 = arith.andi %36, %71 : vector<1x256xi1>
    %609 = arith.extui %608 : vector<1x256xi1> to vector<1x256xi32>
    %610 = arith.sitofp %609 : vector<1x256xi32> to vector<1x256xf32>
    %611 = arith.mulf %607, %610 : vector<1x256xf32>
    %612 = arith.addf %560, %611 : vector<1x256xf32>
    %c41 = arith.constant 41 : index
    %613 = memref.load %arg2[%c41] : memref<98xf32, #tpu.memory_space<smem>>
    %614 = vector.broadcast %613 : f32 to vector<1x256xf32>
    %615 = arith.mulf %614, %3 : vector<1x256xf32>
    %c90 = arith.constant 90 : index
    %616 = memref.load %arg2[%c90] : memref<98xf32, #tpu.memory_space<smem>>
    %617 = vector.broadcast %616 : f32 to vector<1x256xf32>
    %618 = arith.mulf %617, %4 : vector<1x256xf32>
    %619 = arith.addf %615, %618 : vector<1x256xf32>
    %c221_i32 = arith.constant 221 : i32
    %620 = tpu.dynamic_rotate %619 by %c221_i32 dim 1 : vector<1x256xf32>, i32 -> vector<1x256xf32>
    %621 = arith.andi %36, %76 : vector<1x256xi1>
    %622 = arith.extui %621 : vector<1x256xi1> to vector<1x256xi32>
    %623 = arith.sitofp %622 : vector<1x256xi32> to vector<1x256xf32>
    %624 = arith.mulf %620, %623 : vector<1x256xf32>
    %625 = arith.addf %573, %624 : vector<1x256xf32>
    %c42 = arith.constant 42 : index
    %626 = memref.load %arg2[%c42] : memref<98xf32, #tpu.memory_space<smem>>
    %627 = vector.broadcast %626 : f32 to vector<1x256xf32>
    %628 = arith.mulf %627, %3 : vector<1x256xf32>
    %c91 = arith.constant 91 : index
    %629 = memref.load %arg2[%c91] : memref<98xf32, #tpu.memory_space<smem>>
    %630 = vector.broadcast %629 : f32 to vector<1x256xf32>
    %631 = arith.mulf %630, %4 : vector<1x256xf32>
    %632 = arith.addf %628, %631 : vector<1x256xf32>
    %c211_i32 = arith.constant 211 : i32
    %633 = tpu.dynamic_rotate %632 by %c211_i32 dim 1 : vector<1x256xf32>, i32 -> vector<1x256xf32>
    %634 = arith.andi %41, %46 : vector<1x256xi1>
    %635 = arith.extui %634 : vector<1x256xi1> to vector<1x256xi32>
    %636 = arith.sitofp %635 : vector<1x256xi32> to vector<1x256xf32>
    %637 = arith.mulf %633, %636 : vector<1x256xf32>
    %638 = arith.addf %586, %637 : vector<1x256xf32>
    %c43 = arith.constant 43 : index
    %639 = memref.load %arg2[%c43] : memref<98xf32, #tpu.memory_space<smem>>
    %640 = vector.broadcast %639 : f32 to vector<1x256xf32>
    %641 = arith.mulf %640, %3 : vector<1x256xf32>
    %c92 = arith.constant 92 : index
    %642 = memref.load %arg2[%c92] : memref<98xf32, #tpu.memory_space<smem>>
    %643 = vector.broadcast %642 : f32 to vector<1x256xf32>
    %644 = arith.mulf %643, %4 : vector<1x256xf32>
    %645 = arith.addf %641, %644 : vector<1x256xf32>
    %c210_i32 = arith.constant 210 : i32
    %646 = tpu.dynamic_rotate %645 by %c210_i32 dim 1 : vector<1x256xf32>, i32 -> vector<1x256xf32>
    %647 = arith.andi %41, %51 : vector<1x256xi1>
    %648 = arith.extui %647 : vector<1x256xi1> to vector<1x256xi32>
    %649 = arith.sitofp %648 : vector<1x256xi32> to vector<1x256xf32>
    %650 = arith.mulf %646, %649 : vector<1x256xf32>
    %651 = arith.addf %599, %650 : vector<1x256xf32>
    %c44 = arith.constant 44 : index
    %652 = memref.load %arg2[%c44] : memref<98xf32, #tpu.memory_space<smem>>
    %653 = vector.broadcast %652 : f32 to vector<1x256xf32>
    %654 = arith.mulf %653, %3 : vector<1x256xf32>
    %c93 = arith.constant 93 : index
    %655 = memref.load %arg2[%c93] : memref<98xf32, #tpu.memory_space<smem>>
    %656 = vector.broadcast %655 : f32 to vector<1x256xf32>
    %657 = arith.mulf %656, %4 : vector<1x256xf32>
    %658 = arith.addf %654, %657 : vector<1x256xf32>
    %c209_i32 = arith.constant 209 : i32
    %659 = tpu.dynamic_rotate %658 by %c209_i32 dim 1 : vector<1x256xf32>, i32 -> vector<1x256xf32>
    %660 = arith.andi %41, %56 : vector<1x256xi1>
    %661 = arith.extui %660 : vector<1x256xi1> to vector<1x256xi32>
    %662 = arith.sitofp %661 : vector<1x256xi32> to vector<1x256xf32>
    %663 = arith.mulf %659, %662 : vector<1x256xf32>
    %664 = arith.addf %612, %663 : vector<1x256xf32>
    %c45 = arith.constant 45 : index
    %665 = memref.load %arg2[%c45] : memref<98xf32, #tpu.memory_space<smem>>
    %666 = vector.broadcast %665 : f32 to vector<1x256xf32>
    %667 = arith.mulf %666, %3 : vector<1x256xf32>
    %c94 = arith.constant 94 : index
    %668 = memref.load %arg2[%c94] : memref<98xf32, #tpu.memory_space<smem>>
    %669 = vector.broadcast %668 : f32 to vector<1x256xf32>
    %670 = arith.mulf %669, %4 : vector<1x256xf32>
    %671 = arith.addf %667, %670 : vector<1x256xf32>
    %c208_i32 = arith.constant 208 : i32
    %672 = tpu.dynamic_rotate %671 by %c208_i32 dim 1 : vector<1x256xf32>, i32 -> vector<1x256xf32>
    %673 = arith.andi %41, %61 : vector<1x256xi1>
    %674 = arith.extui %673 : vector<1x256xi1> to vector<1x256xi32>
    %675 = arith.sitofp %674 : vector<1x256xi32> to vector<1x256xf32>
    %676 = arith.mulf %672, %675 : vector<1x256xf32>
    %677 = arith.addf %625, %676 : vector<1x256xf32>
    %c46 = arith.constant 46 : index
    %678 = memref.load %arg2[%c46] : memref<98xf32, #tpu.memory_space<smem>>
    %679 = vector.broadcast %678 : f32 to vector<1x256xf32>
    %680 = arith.mulf %679, %3 : vector<1x256xf32>
    %c95 = arith.constant 95 : index
    %681 = memref.load %arg2[%c95] : memref<98xf32, #tpu.memory_space<smem>>
    %682 = vector.broadcast %681 : f32 to vector<1x256xf32>
    %683 = arith.mulf %682, %4 : vector<1x256xf32>
    %684 = arith.addf %680, %683 : vector<1x256xf32>
    %c207_i32 = arith.constant 207 : i32
    %685 = tpu.dynamic_rotate %684 by %c207_i32 dim 1 : vector<1x256xf32>, i32 -> vector<1x256xf32>
    %686 = arith.andi %41, %66 : vector<1x256xi1>
    %687 = arith.extui %686 : vector<1x256xi1> to vector<1x256xi32>
    %688 = arith.sitofp %687 : vector<1x256xi32> to vector<1x256xf32>
    %689 = arith.mulf %685, %688 : vector<1x256xf32>
    %690 = arith.addf %638, %689 : vector<1x256xf32>
    %c47 = arith.constant 47 : index
    %691 = memref.load %arg2[%c47] : memref<98xf32, #tpu.memory_space<smem>>
    %692 = vector.broadcast %691 : f32 to vector<1x256xf32>
    %693 = arith.mulf %692, %3 : vector<1x256xf32>
    %c96 = arith.constant 96 : index
    %694 = memref.load %arg2[%c96] : memref<98xf32, #tpu.memory_space<smem>>
    %695 = vector.broadcast %694 : f32 to vector<1x256xf32>
    %696 = arith.mulf %695, %4 : vector<1x256xf32>
    %697 = arith.addf %693, %696 : vector<1x256xf32>
    %c206_i32 = arith.constant 206 : i32
    %698 = tpu.dynamic_rotate %697 by %c206_i32 dim 1 : vector<1x256xf32>, i32 -> vector<1x256xf32>
    %699 = arith.andi %41, %71 : vector<1x256xi1>
    %700 = arith.extui %699 : vector<1x256xi1> to vector<1x256xi32>
    %701 = arith.sitofp %700 : vector<1x256xi32> to vector<1x256xf32>
    %702 = arith.mulf %698, %701 : vector<1x256xf32>
    %703 = arith.addf %651, %702 : vector<1x256xf32>
    %c48 = arith.constant 48 : index
    %704 = memref.load %arg2[%c48] : memref<98xf32, #tpu.memory_space<smem>>
    %705 = vector.broadcast %704 : f32 to vector<1x256xf32>
    %706 = arith.mulf %705, %3 : vector<1x256xf32>
    %c97 = arith.constant 97 : index
    %707 = memref.load %arg2[%c97] : memref<98xf32, #tpu.memory_space<smem>>
    %708 = vector.broadcast %707 : f32 to vector<1x256xf32>
    %709 = arith.mulf %708, %4 : vector<1x256xf32>
    %710 = arith.addf %706, %709 : vector<1x256xf32>
    %c205_i32 = arith.constant 205 : i32
    %711 = tpu.dynamic_rotate %710 by %c205_i32 dim 1 : vector<1x256xf32>, i32 -> vector<1x256xf32>
    %712 = arith.andi %41, %76 : vector<1x256xi1>
    %713 = arith.extui %712 : vector<1x256xi1> to vector<1x256xi32>
    %714 = arith.sitofp %713 : vector<1x256xi32> to vector<1x256xf32>
    %715 = arith.mulf %711, %714 : vector<1x256xf32>
    %716 = arith.addf %664, %715 : vector<1x256xf32>
    %717 = arith.addf %716, %677 : vector<1x256xf32>
    %718 = arith.addf %690, %703 : vector<1x256xf32>
    %719 = arith.addf %717, %718 : vector<1x256xf32>
    %cst_37 = arith.constant 0.000000e+00 : f32
    %720 = vector.broadcast %cst_37 : f32 to vector<1x256xf32>
    %721 = arith.subf %720, %719 : vector<1x256xf32>
    %722 = math.exp %721 : vector<1x256xf32>
    %cst_38 = arith.constant 1.000000e+00 : f32
    %723 = vector.broadcast %cst_38 : f32 to vector<1x256xf32>
    %724 = arith.addf %723, %722 : vector<1x256xf32>
    %cst_39 = arith.constant 1.000000e+00 : f32
    %725 = vector.broadcast %cst_39 : f32 to vector<1x256xf32>
    %726 = arith.divf %725, %724 : vector<1x256xf32>
    %727 = vector.shape_cast %726 : vector<1x256xf32> to vector<1x1x256xf32>
    %728 = vector.broadcast %727 : vector<1x1x256xf32> to vector<1x4x256xf32>
    %729 = arith.mulf %0, %728 : vector<1x4x256xf32>
    %c0_40 = arith.constant 0 : index
    %c0_41 = arith.constant 0 : index
    %c0_42 = arith.constant 0 : index
    %730 = vector.load %arg4[%c0_40, %c0_41, %c0_42] : memref<1x4x256xf32, #tpu.memory_space<vmem>>, vector<1x4x256xf32>
    tpu.vector_store %arg4[%c0_40, %c0_41, %c0_42], %729 {strides = array<i32>} : memref<1x4x256xf32, #tpu.memory_space<vmem>>, vector<1x4x256xf32>,
    return
  }
  func.func @transform_0(%arg0: i32) -> (i32, i32, i32) {
    %c0_i32 = arith.constant 0 : i32
    %c0_i32_0 = arith.constant 0 : i32
    %c0_i32_1 = arith.constant 0 : i32
    return %arg0, %c0_i32, %c0_i32_0 : i32, i32, i32
  }
  func.func @transform_1(%arg0: i32) -> i32 {
    %c0_i32 = arith.constant 0 : i32
    %c0_i32_0 = arith.constant 0 : i32
    return %c0_i32 : i32
  }
  func.func @transform_2(%arg0: i32) -> (i32, i32) {
    %c0_i32 = arith.constant 0 : i32
    %c0_i32_0 = arith.constant 0 : i32
    %c0_i32_1 = arith.constant 0 : i32
    return %c0_i32, %c0_i32_0 : i32, i32
  }
  func.func @transform_3(%arg0: i32) -> (i32, i32, i32) {
    %c0_i32 = arith.constant 0 : i32
    %c0_i32_0 = arith.constant 0 : i32
    %c0_i32_1 = arith.constant 0 : i32
    return %arg0, %c0_i32, %c0_i32_0 : i32, i32, i32
  }
}

</mosaic_0001>

<llo_original>
// kernel: tpu_custom_call.1
$region0: #{tpu_custom_call.1}
  #allocation0 [shape = 'u32[]', space=smem, size = 0x4, offset = 0x4, fixed_abs, tag = 'smem constant byte address 0x4 - core index']
  #allocation1 [shape = 'u32[144,128]{1,0:T(1,128)}', space=vmem, size = 0x12000, scoped, tag = 'internal scratch']
  %s0 = inlined_call_operand.hbm [shape: f32[2,4,256], index: 0, kind: input, shape index: {}]
  %s1 = inlined_call_operand.vmem [shape: f32[98], index: 1, kind: input, shape index: {}]
  %s2 = inlined_call_operand.vmem [shape: s32[2,256], index: 2, kind: input, shape index: {}]
  %s3 = inlined_call_operand.hbm [shape: f32[2,4,256], index: 3, kind: output, shape index: {}]
  %s4 = sld [smem:[#allocation0]]
  $region53: #{tpu_custom_call.1} parent=0
    _
  %s6 = ssub.s32 1, %s4
  %s7 = scalar_select 0, %s6, %s4
  $region1: #{tpu_custom_call.1} parent=0
    #allocation2 [shape = 'u8[8192]{0}', space=vmem, size = 0x2000, scoped, tag = 'input window, operand 0']
    #allocation3 [shape = 's32[2]{0}', space=sflag, size = 0x8, scoped, tag = 'scoped memory for tpu_custom_call.1']
    #allocation4 [shape = 's32[2]{0}', space=sflag, size = 0x8, scoped, tag = 'scoped memory for tpu_custom_call.1']
    #allocation5 [shape = 's32[2]{0}', space=sflag, size = 0x8, scoped, tag = 'scoped memory for tpu_custom_call.1']
    #allocation6 [shape = 'u8[512]{0}', space=smem, size = 0x200, scoped, tag = 'input window, operand 1, single buffered']
    #allocation7 [shape = 'u8[8192]{0}', space=vmem, size = 0x2000, scoped, tag = 'output window, operand 0']
    %8 = vsyncpa [#allocation3], 0
    %s9 = scalar_lea.sflag [#allocation3], 1
    %10 = vsyncpa %s9, 0
    %11 = vsyncpa [#allocation5], 0
    %12 = vsyncpa [#allocation4], 0
    %s13 = scalar_lea.sflag [#allocation4], 1
    %14 = vsyncpa %s13, 0
    loop: start=0, step=1, limit=4
    $region2: #{tpu_custom_call.1} parent=1 // loop_pre_header
      _
    $region3: #{tpu_custom_call.1} parent=1 // loop_header
      %s16 = sphi 0, %s20
      %p17 = scmp.ge.s32.totalorder %s16, 4
      %s26 = sphi 0, %s28
      %s29 = sphi 0, %s26
      %s30 = sphi 0, %s29
      %s46 = sphi 0, %s30
      %s50 = sphi 0, %s50
      %s52 = sphi 0, %s50
      %s53 = sphi 0, %s52
      %s67 = sphi 0, %s53
      %s71 = sphi 0, %s71
      %s73 = sphi 0, %s71
      %s74 = sphi 0, %s73
      %s88 = sphi 0, %s74
      %s94 = sphi 0, %s96
      %s97 = sphi 0, %s94
      %s98 = sphi 0, %s97
      %s114 = sphi 0, %s98
    $region4: #{tpu_custom_call.1} parent=1 // loop_header_branch
      %19 = sbr.rel (%p17) target = $region8
    $region5: #{tpu_custom_call.1} parent=1 // loop_body
      %s21 = ssub.s32 %s16, 1
      %s22 = ssub.s32 %s16, 2
      %s23 = sadd.s32 %s16, 1
      %s24 = ssub.s32 %s16, %s23
      %p25 = scmp.eq.s32.totalorder %s24, 0
      %s27 = sadd.s32 %s26, 1
      %s28 = scalar_select %p25, %s26, %s27
      %p31 = pneg %p25
      %p32 = scmp.eq.s32.totalorder %s16, 1
      %p33 = por %p31, %p32
      %p34 = scmp.ne.s32.totalorder %s26, %s29
      %p35 = scmp.eq.s32.totalorder %s16, 0
      %p36 = por %p34, %p35
      %p37 = scmp.ne.s32.totalorder %s26, %s29
      %p38 = scmp.eq.s32.totalorder %s21, 1
      %p39 = por %p37, %p38
      %p40 = scmp.ne.s32.totalorder %s29, %s30
      %p41 = scmp.eq.s32.totalorder %s21, 0
      %p42 = por %p40, %p41
      %p43 = scmp.ne.s32.totalorder %s29, %s30
      %p44 = scmp.eq.s32.totalorder %s22, 1
      %p45 = por %p43, %p44
      %p47 = scmp.ne.s32.totalorder %s30, %s46
      %p48 = scmp.eq.s32.totalorder %s22, 0
      %p49 = por %p47, %p48
      %s51 = sadd.s32 %s50, 1
      %p54 = scmp.eq.s32.totalorder %s16, 1
      %p55 = scmp.ne.s32.totalorder %s50, %s52
      %p56 = scmp.eq.s32.totalorder %s16, 0
      %p57 = por %p55, %p56
      %p58 = scmp.ne.s32.totalorder %s50, %s52
      %p59 = scmp.eq.s32.totalorder %s21, 1
      %p60 = por %p58, %p59
      %p61 = scmp.ne.s32.totalorder %s52, %s53
      %p62 = scmp.eq.s32.totalorder %s21, 0
      %p63 = por %p61, %p62
      %p64 = scmp.ne.s32.totalorder %s52, %s53
      %p65 = scmp.eq.s32.totalorder %s22, 1
      %p66 = por %p64, %p65
      %p68 = scmp.ne.s32.totalorder %s53, %s67
      %p69 = scmp.eq.s32.totalorder %s22, 0
      %p70 = por %p68, %p69
      %s72 = sadd.s32 %s71, 1
      %p75 = scmp.eq.s32.totalorder %s16, 1
      %p76 = scmp.ne.s32.totalorder %s71, %s73
      %p77 = scmp.eq.s32.totalorder %s16, 0
      %p78 = por %p76, %p77
      %p79 = scmp.ne.s32.totalorder %s71, %s73
      %p80 = scmp.eq.s32.totalorder %s21, 1
      %p81 = por %p79, %p80
      %p82 = scmp.ne.s32.totalorder %s73, %s74
      %p83 = scmp.eq.s32.totalorder %s21, 0
      %p84 = por %p82, %p83
      %p85 = scmp.ne.s32.totalorder %s73, %s74
      %p86 = scmp.eq.s32.totalorder %s22, 1
      %p87 = por %p85, %p86
      %p89 = scmp.ne.s32.totalorder %s74, %s88
      %p90 = scmp.eq.s32.totalorder %s22, 0
      %p91 = por %p89, %p90
      %s92 = ssub.s32 %s16, %s23
      %p93 = scmp.eq.s32.totalorder %s92, 0
      %s95 = sadd.s32 %s94, 1
      %s96 = scalar_select %p93, %s94, %s95
      %p99 = pneg %p93
      %p100 = scmp.eq.s32.totalorder %s16, 1
      %p101 = por %p99, %p100
      %p102 = scmp.ne.s32.totalorder %s94, %s97
      %p103 = scmp.eq.s32.totalorder %s16, 0
      %p104 = por %p102, %p103
      %p105 = scmp.ne.s32.totalorder %s94, %s97
      %p106 = scmp.eq.s32.totalorder %s21, 1
      %p107 = por %p105, %p106
      %p108 = scmp.ne.s32.totalorder %s97, %s98
      %p109 = scmp.eq.s32.totalorder %s21, 0
      %p110 = por %p108, %p109
      %p111 = scmp.ne.s32.totalorder %s97, %s98
      %p112 = scmp.eq.s32.totalorder %s22, 1
      %p113 = por %p111, %p112
      %p115 = scmp.ne.s32.totalorder %s98, %s114
      %p116 = scmp.eq.s32.totalorder %s22, 0
      %p117 = por %p115, %p116
      %p118 = scmp.le.s32.totalorder 1, %s16
      %p119 = scmp.lt.s32.totalorder %s16, 3
      %p120 = pnand %p118, %p119
      %p121 = pneg %p120
      // Predicated region
      $region9: #{tpu_custom_call.1} parent=5 // pred_check
        _
      $region10: #{tpu_custom_call.1} parent=5 // pred_check_branch
        %123 = sbr.rel (%p120) target = $region12
      $region11: #{tpu_custom_call.1} parent=5 // pred_region
        %s124 = ssub.s32 %s16, 1
        // Predicated region
        $region13: #{tpu_custom_call.1} parent=11 // pred_check
          %p125 = pneg %p63
        $region14: #{tpu_custom_call.1} parent=11 // pred_check_branch
          %127 = sbr.rel (%p125) target = $region16
        $region15: #{tpu_custom_call.1} parent=11 // pred_region
          %s129 = ssub.s32 16, 16
          %130 = vsyncadd [#allocation5], %s129
          %s132 = sshll.u32 %s1, 4
          %s133 = int_to_ptr.vmem [resolvable:$true] %s132
          %135 = dma.vmem_to_smem %s133, 16, [#allocation6], [#allocation5]
        $region16: #{tpu_custom_call.1} parent=11 // pred_fallthru
          _
        // Predicated region
        $region17: #{tpu_custom_call.1} parent=11 // pred_check
          %p136 = pneg %p84
        $region18: #{tpu_custom_call.1} parent=11 // pred_check_branch
          %138 = sbr.rel (%p136) target = $region20
        $region19: #{tpu_custom_call.1} parent=11 // pred_region
          _
        $region20: #{tpu_custom_call.1} parent=11 // pred_fallthru
          _
      $region12: #{tpu_custom_call.1} parent=5 // pred_fallthru
        _
      %p139 = scmp.lt.s32.totalorder %s16, 2
      // Predicated region
      $region21: #{tpu_custom_call.1} parent=5 // pred_check
        %p140 = pneg %p139
      $region22: #{tpu_custom_call.1} parent=5 // pred_check_branch
        %142 = sbr.rel (%p140) target = $region24
      $region23: #{tpu_custom_call.1} parent=5 // pred_region
        // Predicated region
        $region25: #{tpu_custom_call.1} parent=23 // pred_check
          %p143 = pneg %p36
        $region26: #{tpu_custom_call.1} parent=23 // pred_check_branch
          %145 = sbr.rel (%p143) target = $region28
        $region27: #{tpu_custom_call.1} parent=23 // pred_region
          %s146 = sand.u32 %s26, 1
          %s147 = scalar_lea.sflag [#allocation3], %s146
          %s148 = sand.u32 %s26, 1
          %s149 = smul.addr %s148, 8
          %s150 = scalar_lea.vmem [#allocation2], %s149
          %s152 = ssub.s32 128, 128
          %153 = vsyncadd %s147, %s152
          %s154 = smul.addr %s16, 2
          %s155 = smul.addr %s154, 64
          %s156 = scalar_lea.hbm %s0, %s155
          %s158 = sshll.u32 %s150, 4
          %s159 = int_to_ptr.vmem [resolvable:$true] %s158
          %161 = dma.hbm_to_vmem [thread:$0]  %s156, 128, %s159, %s147
        $region28: #{tpu_custom_call.1} parent=23 // pred_fallthru
          _
      $region24: #{tpu_custom_call.1} parent=5 // pred_fallthru
        _
      %p162 = scmp.le.s32.totalorder 1, %s16
      %p163 = scmp.lt.s32.totalorder %s16, 3
      %p164 = pnand %p162, %p163
      %p165 = pneg %p164
      // Predicated region
      $region29: #{tpu_custom_call.1} parent=5 // pred_check
        _
      $region30: #{tpu_custom_call.1} parent=5 // pred_check_branch
        %167 = sbr.rel (%p164) target = $region32
      $region31: #{tpu_custom_call.1} parent=5 // pred_region
        %s168 = ssub.s32 %s16, 1
        %s169 = sand.u32 %s29, 1
        %s170 = scalar_lea.sflag [#allocation3], %s169
        %s171 = sand.u32 %s29, 1
        %s172 = smul.addr %s171, 8
        %s173 = scalar_lea.vmem [#allocation2], %s172
        // Predicated region
        $region33: #{tpu_custom_call.1} parent=31 // pred_check
          %p174 = pneg %p42
        $region34: #{tpu_custom_call.1} parent=31 // pred_check_branch
          %176 = sbr.rel (%p174) target = $region36
        $region35: #{tpu_custom_call.1} parent=31 // pred_region
          %177 = dma.done %s170, 128
        $region36: #{tpu_custom_call.1} parent=31 // pred_fallthru
          _
        // Predicated region
        $region37: #{tpu_custom_call.1} parent=31 // pred_check
          %p178 = pneg %p63
        $region38: #{tpu_custom_call.1} parent=31 // pred_check_branch
          %180 = sbr.rel (%p178) target = $region40
        $region39: #{tpu_custom_call.1} parent=31 // pred_region
          %181 = dma.done [#allocation5], 16
        $region40: #{tpu_custom_call.1} parent=31 // pred_fallthru
          _
        %182 = sfence
        %s183 = sand.u32 %s29, 1
        %s184 = scalar_lea.sflag [#allocation3], %s183
        %s185 = sand.u32 %s29, 1
        %s186 = smul.addr %s185, 8
        %s187 = scalar_lea.vmem [#allocation2], %s186
        %p188 = pneg %p42
        %p189 = pneg %p39
        %p190 = pneg %p63
        %p191 = pneg %p60
        %p192 = pneg %p84
        %p193 = pneg %p81
        %p194 = pneg %p110
        %p195 = pneg %p107
        %s196 = sand.u32 %s97, 1
        %s197 = scalar_lea.sflag [#allocation4], %s196
        %s198 = sand.u32 %s97, 1
        %s199 = smul.addr %s198, 8
        %s200 = scalar_lea.vmem [#allocation7], %s199
        %v201 = vld [vmem:[%s173] sm:$0xff]
        %v203 = vcombine.high %v201, %v201
        %vm205 = vcmask 1043456
        %v206 = vsel %vm205, %v201, 0.0
        %v207 = vrot.slane %v206, 4
        %v208 = vadd.f32 %v206, %v207
        %v209 = vrot.slane %v208, 2
        %v210 = vadd.f32 %v208, %v209
        %v211 = vrot.slane %v210, 1
        %v212 = vadd.f32 %v210, %v211
        %v213 = vsel %vm205, %v203, 0.0
        %v214 = vrot.slane %v213, 4
        %v215 = vadd.f32 %v213, %v214
        %v216 = vrot.slane %v215, 2
        %v217 = vadd.f32 %v215, %v216
        %v218 = vrot.slane %v217, 1
        %v219 = vadd.f32 %v217, %v218
        %v220 = vmul.f32 %v212, 0.25
        %v221 = vmul.f32 %v219, 0.25
        %v222 = vsel %vm205, %v201, -inf
        %v223 = vrot.slane %v222, 4
        %v224 = vmax.f32 %v222, %v223
        %v225 = vrot.slane %v224, 2
        %v226 = vmax.f32 %v224, %v225
        %v227 = vrot.slane %v226, 1
        %v228 = vmax.f32 %v226, %v227
        %v229 = vsel %vm205, %v203, -inf
        %v230 = vrot.slane %v229, 4
        %v231 = vmax.f32 %v229, %v230
        %v232 = vrot.slane %v231, 2
        %v233 = vmax.f32 %v231, %v232
        %v234 = vrot.slane %v233, 1
        %v235 = vmax.f32 %v233, %v234
        %v236 = vld [vmem:[%s2] ss:$2 sm:$0x3]
        %s237 = scalar_lea.vmem %s2, 1
        %v238 = vld [vmem:[%s237] ss:$2 sm:$0x3]
        %vm239 = vcmp.ge.s32.totalorder %v236, 3
        %vm240 = vcmp.lt.s32.totalorder %v236, 19
        %vm241 = vmand %vm239, %vm240
        %vm242 = vcmp.ge.s32.totalorder %v236, 2
        %vm243 = vcmp.lt.s32.totalorder %v236, 18
        %vm244 = vmand %vm242, %vm243
        %vm245 = vcmp.ge.s32.totalorder %v236, 1
        %vm246 = vcmp.lt.s32.totalorder %v236, 17
        %vm247 = vmand %vm245, %vm246
        %vm248 = vcmp.ge.s32.totalorder %v236, 0
        %vm249 = vcmp.lt.s32.totalorder %v236, 16
        %vm250 = vmand %vm248, %vm249
        %vm251 = vcmp.ge.s32.totalorder %v236, 4294967295
        %vm252 = vcmp.lt.s32.totalorder %v236, 15
        %vm253 = vmand %vm251, %vm252
        %vm254 = vcmp.ge.s32.totalorder %v236, 4294967294
        %vm255 = vcmp.lt.s32.totalorder %v236, 14
        %vm256 = vmand %vm254, %vm255
        %vm257 = vcmp.ge.s32.totalorder %v236, 4294967293
        %vm258 = vcmp.lt.s32.totalorder %v236, 13
        %vm259 = vmand %vm257, %vm258
        %vm260 = vcmp.ge.s32.totalorder %v238, 3
        %vm261 = vcmp.lt.s32.totalorder %v238, 19
        %vm262 = vmand %vm260, %vm261
        %vm263 = vcmp.ge.s32.totalorder %v238, 2
        %vm264 = vcmp.lt.s32.totalorder %v238, 18
        %vm265 = vmand %vm263, %vm264
        %vm266 = vcmp.ge.s32.totalorder %v238, 1
        %vm267 = vcmp.lt.s32.totalorder %v238, 17
        %vm268 = vmand %vm266, %vm267
        %vm269 = vcmp.ge.s32.totalorder %v238, 0
        %vm270 = vcmp.lt.s32.totalorder %v238, 16
        %vm271 = vmand %vm269, %vm270
        %vm272 = vcmp.ge.s32.totalorder %v238, 4294967295
        %vm273 = vcmp.lt.s32.totalorder %v238, 15
        %vm274 = vmand %vm272, %vm273
        %vm275 = vcmp.ge.s32.totalorder %v238, 4294967294
        %vm276 = vcmp.lt.s32.totalorder %v238, 14
        %vm277 = vmand %vm275, %vm276
        %vm278 = vcmp.ge.s32.totalorder %v238, 4294967293
        %vm279 = vcmp.lt.s32.totalorder %v238, 13
        %vm280 = vmand %vm278, %vm279
        %s281 = sld [smem:[#allocation6]]
        %v282 = vstv %s281
        %v283 = vmul.f32 %v282, %v220
        %v284 = vmul.f32 %v282, %v221
        %s285 = sld [smem:[#allocation6 + $0x31]]
        %v286 = vstv %s285
        %v287 = vmul.f32 %v286, %v228
        %v288 = vmul.f32 %v286, %v235
        %v289 = vadd.f32 %v283, %v287
        %v290 = vadd.f32 %v284, %v288
        %291 = vrot.lane.b32.xlu0 %v289, 51
        %v292 = vpop.permute.xlu0 %291
        %293 = vrot.lane.b32.xlu0 %v290, 51
        %v294 = vpop.permute.xlu0 %293
        %v295 = vlaneseq
        %v296 = vand.u32 %v295, 127
        %vm297 = vcmp.lt.s32.totalorder %v296, 51
        %v298 = vsel %vm297, %v292, %v294
        %v299 = vsel %vm297, %v294, %v292
        %vm300 = vmand %vm241, %vm262
        %v301 = vsel %vm300, 1, 0
        %v302 = vcvt.s32.f32 %v301
        %v304 = vlaneseq
        %v305 = vshrl.u32 %v304, 7
        %v306 = vsub.s32 0, %v305
        %v307 = vrot.slane %v302, %v306
        %v308 = vlaneseq
        %v309 = vshrl.u32 %v308, 7
        %v310 = vsub.s32 1, %v309
        %v311 = vrot.slane %v302, %v310
        %v314 = vmul.f32 %v299, %v307
        %v315 = vmul.f32 %v298, %v311
        %v316 = vadd.f32 %v314, 0.0
        %v317 = vadd.f32 %v315, 0.0
        %s318 = sld [smem:[#allocation6 + $0x1]]
        %v319 = vstv %s318
        %v320 = vmul.f32 %v319, %v220
        %v321 = vmul.f32 %v319, %v221
        %s322 = sld [smem:[#allocation6 + $0x32]]
        %v323 = vstv %s322
        %v324 = vmul.f32 %v323, %v228
        %v325 = vmul.f32 %v323, %v235
        %v326 = vadd.f32 %v320, %v324
        %v327 = vadd.f32 %v321, %v325
        %328 = vrot.lane.b32.xlu0 %v326, 50
        %v329 = vpop.permute.xlu0 %328
        %330 = vrot.lane.b32.xlu0 %v327, 50
        %v331 = vpop.permute.xlu0 %330
        %vm332 = vcmp.lt.s32.totalorder %v296, 50
        %v333 = vsel %vm332, %v329, %v331
        %v334 = vsel %vm332, %v331, %v329
        %vm335 = vmand %vm241, %vm265
        %v336 = vsel %vm335, 1, 0
        %v337 = vcvt.s32.f32 %v336
        %v339 = vlaneseq
        %v340 = vshrl.u32 %v339, 7
        %v341 = vsub.s32 0, %v340
        %v342 = vrot.slane %v337, %v341
        %v343 = vlaneseq
        %v344 = vshrl.u32 %v343, 7
        %v345 = vsub.s32 1, %v344
        %v346 = vrot.slane %v337, %v345
        %v349 = vmul.f32 %v334, %v342
        %v350 = vmul.f32 %v333, %v346
        %v351 = vadd.f32 %v349, 0.0
        %v352 = vadd.f32 %v350, 0.0
        %s353 = sld [smem:[#allocation6 + $0x2]]
        %v354 = vstv %s353
        %v355 = vmul.f32 %v354, %v220
        %v356 = vmul.f32 %v354, %v221
        %s357 = sld [smem:[#allocation6 + $0x33]]
        %v358 = vstv %s357
        %v359 = vmul.f32 %v358, %v228
        %v360 = vmul.f32 %v358, %v235
        %v361 = vadd.f32 %v355, %v359
        %v362 = vadd.f32 %v356, %v360
        %363 = vrot.lane.b32.xlu0 %v361, 49
        %v364 = vpop.permute.xlu0 %363
        %365 = vrot.lane.b32.xlu0 %v362, 49
        %v366 = vpop.permute.xlu0 %365
        %vm367 = vcmp.lt.s32.totalorder %v296, 49
        %v368 = vsel %vm367, %v364, %v366
        %v369 = vsel %vm367, %v366, %v364
        %vm370 = vmand %vm241, %vm268
        %v371 = vsel %vm370, 1, 0
        %v372 = vcvt.s32.f32 %v371
        %v374 = vlaneseq
        %v375 = vshrl.u32 %v374, 7
        %v376 = vsub.s32 0, %v375
        %v377 = vrot.slane %v372, %v376
        %v378 = vlaneseq
        %v379 = vshrl.u32 %v378, 7
        %v380 = vsub.s32 1, %v379
        %v381 = vrot.slane %v372, %v380
        %v384 = vmul.f32 %v369, %v377
        %v385 = vmul.f32 %v368, %v381
        %v386 = vadd.f32 %v384, 0.0
        %v387 = vadd.f32 %v385, 0.0
        %s388 = sld [smem:[#allocation6 + $0x3]]
        %v389 = vstv %s388
        %v390 = vmul.f32 %v389, %v220
        %v391 = vmul.f32 %v389, %v221
        %s392 = sld [smem:[#allocation6 + $0x34]]
        %v393 = vstv %s392
        %v394 = vmul.f32 %v393, %v228
        %v395 = vmul.f32 %v393, %v235
        %v396 = vadd.f32 %v390, %v394
        %v397 = vadd.f32 %v391, %v395
        %398 = vrot.lane.b32.xlu0 %v396, 48
        %v399 = vpop.permute.xlu0 %398
        %400 = vrot.lane.b32.xlu0 %v397, 48
        %v401 = vpop.permute.xlu0 %400
        %vm402 = vcmp.lt.s32.totalorder %v296, 48
        %v403 = vsel %vm402, %v399, %v401
        %v404 = vsel %vm402, %v401, %v399
        %vm405 = vmand %vm241, %vm271
        %v406 = vsel %vm405, 1, 0
        %v407 = vcvt.s32.f32 %v406
        %v409 = vlaneseq
        %v410 = vshrl.u32 %v409, 7
        %v411 = vsub.s32 0, %v410
        %v412 = vrot.slane %v407, %v411
        %v413 = vlaneseq
        %v414 = vshrl.u32 %v413, 7
        %v415 = vsub.s32 1, %v414
        %v416 = vrot.slane %v407, %v415
        %v419 = vmul.f32 %v404, %v412
        %v420 = vmul.f32 %v403, %v416
        %v421 = vadd.f32 %v419, 0.0
        %v422 = vadd.f32 %v420, 0.0
        %s423 = sld [smem:[#allocation6 + $0x4]]
        %v424 = vstv %s423
        %v425 = vmul.f32 %v424, %v220
        %v426 = vmul.f32 %v424, %v221
        %s427 = sld [smem:[#allocation6 + $0x35]]
        %v428 = vstv %s427
        %v429 = vmul.f32 %v428, %v228
        %v430 = vmul.f32 %v428, %v235
        %v431 = vadd.f32 %v425, %v429
        %v432 = vadd.f32 %v426, %v430
        %433 = vrot.lane.b32.xlu0 %v431, 47
        %v434 = vpop.permute.xlu0 %433
        %435 = vrot.lane.b32.xlu0 %v432, 47
        %v436 = vpop.permute.xlu0 %435
        %vm437 = vcmp.lt.s32.totalorder %v296, 47
        %v438 = vsel %vm437, %v434, %v436
        %v439 = vsel %vm437, %v436, %v434
        %vm440 = vmand %vm241, %vm274
        %v441 = vsel %vm440, 1, 0
        %v442 = vcvt.s32.f32 %v441
        %v444 = vlaneseq
        %v445 = vshrl.u32 %v444, 7
        %v446 = vsub.s32 0, %v445
        %v447 = vrot.slane %v442, %v446
        %v448 = vlaneseq
        %v449 = vshrl.u32 %v448, 7
        %v450 = vsub.s32 1, %v449
        %v451 = vrot.slane %v442, %v450
        %v454 = vmul.f32 %v439, %v447
        %v455 = vmul.f32 %v438, %v451
        %v456 = vadd.f32 %v316, %v454
        %v457 = vadd.f32 %v317, %v455
        %s458 = sld [smem:[#allocation6 + $0x5]]
        %v459 = vstv %s458
        %v460 = vmul.f32 %v459, %v220
        %v461 = vmul.f32 %v459, %v221
        %s462 = sld [smem:[#allocation6 + $0x36]]
        %v463 = vstv %s462
        %v464 = vmul.f32 %v463, %v228
        %v465 = vmul.f32 %v463, %v235
        %v466 = vadd.f32 %v460, %v464
        %v467 = vadd.f32 %v461, %v465
        %468 = vrot.lane.b32.xlu0 %v466, 46
        %v469 = vpop.permute.xlu0 %468
        %470 = vrot.lane.b32.xlu0 %v467, 46
        %v471 = vpop.permute.xlu0 %470
        %vm472 = vcmp.lt.s32.totalorder %v296, 46
        %v473 = vsel %vm472, %v469, %v471
        %v474 = vsel %vm472, %v471, %v469
        %vm475 = vmand %vm241, %vm277
        %v476 = vsel %vm475, 1, 0
        %v477 = vcvt.s32.f32 %v476
        %v479 = vlaneseq
        %v480 = vshrl.u32 %v479, 7
        %v481 = vsub.s32 0, %v480
        %v482 = vrot.slane %v477, %v481
        %v483 = vlaneseq
        %v484 = vshrl.u32 %v483, 7
        %v485 = vsub.s32 1, %v484
        %v486 = vrot.slane %v477, %v485
        %v489 = vmul.f32 %v474, %v482
        %v490 = vmul.f32 %v473, %v486
        %v491 = vadd.f32 %v351, %v489
        %v492 = vadd.f32 %v352, %v490
        %s493 = sld [smem:[#allocation6 + $0x6]]
        %v494 = vstv %s493
        %v495 = vmul.f32 %v494, %v220
        %v496 = vmul.f32 %v494, %v221
        %s497 = sld [smem:[#allocation6 + $0x37]]
        %v498 = vstv %s497
        %v499 = vmul.f32 %v498, %v228
        %v500 = vmul.f32 %v498, %v235
        %v501 = vadd.f32 %v495, %v499
        %v502 = vadd.f32 %v496, %v500
        %503 = vrot.lane.b32.xlu0 %v501, 45
        %v504 = vpop.permute.xlu0 %503
        %505 = vrot.lane.b32.xlu0 %v502, 45
        %v506 = vpop.permute.xlu0 %505
        %vm507 = vcmp.lt.s32.totalorder %v296, 45
        %v508 = vsel %vm507, %v504, %v506
        %v509 = vsel %vm507, %v506, %v504
        %vm510 = vmand %vm241, %vm280
        %v511 = vsel %vm510, 1, 0
        %v512 = vcvt.s32.f32 %v511
        %v514 = vlaneseq
        %v515 = vshrl.u32 %v514, 7
        %v516 = vsub.s32 0, %v515
        %v517 = vrot.slane %v512, %v516
        %v518 = vlaneseq
        %v519 = vshrl.u32 %v518, 7
        %v520 = vsub.s32 1, %v519
        %v521 = vrot.slane %v512, %v520
        %v524 = vmul.f32 %v509, %v517
        %v525 = vmul.f32 %v508, %v521
        %v526 = vadd.f32 %v386, %v524
        %v527 = vadd.f32 %v387, %v525
        %s528 = sld [smem:[#allocation6 + $0x7]]
        %v529 = vstv %s528
        %v530 = vmul.f32 %v529, %v220
        %v531 = vmul.f32 %v529, %v221
        %s532 = sld [smem:[#allocation6 + $0x38]]
        %v533 = vstv %s532
        %v534 = vmul.f32 %v533, %v228
        %v535 = vmul.f32 %v533, %v235
        %v536 = vadd.f32 %v530, %v534
        %v537 = vadd.f32 %v531, %v535
        %538 = vrot.lane.b32.xlu0 %v536, 35
        %v539 = vpop.permute.xlu0 %538
        %540 = vrot.lane.b32.xlu0 %v537, 35
        %v541 = vpop.permute.xlu0 %540
        %vm542 = vcmp.lt.s32.totalorder %v296, 35
        %v543 = vsel %vm542, %v539, %v541
        %v544 = vsel %vm542, %v541, %v539
        %vm545 = vmand %vm244, %vm262
        %v546 = vsel %vm545, 1, 0
        %v547 = vcvt.s32.f32 %v546
        %v549 = vlaneseq
        %v550 = vshrl.u32 %v549, 7
        %v551 = vsub.s32 0, %v550
        %v552 = vrot.slane %v547, %v551
        %v553 = vlaneseq
        %v554 = vshrl.u32 %v553, 7
        %v555 = vsub.s32 1, %v554
        %v556 = vrot.slane %v547, %v555
        %v559 = vmul.f32 %v544, %v552
        %v560 = vmul.f32 %v543, %v556
        %v561 = vadd.f32 %v421, %v559
        %v562 = vadd.f32 %v422, %v560
        %s563 = sld [smem:[#allocation6 + $0x8]]
        %v564 = vstv %s563
        %v565 = vmul.f32 %v564, %v220
        %v566 = vmul.f32 %v564, %v221
        %s567 = sld [smem:[#allocation6 + $0x39]]
        %v568 = vstv %s567
        %v569 = vmul.f32 %v568, %v228
        %v570 = vmul.f32 %v568, %v235
        %v571 = vadd.f32 %v565, %v569
        %v572 = vadd.f32 %v566, %v570
        %573 = vrot.lane.b32.xlu0 %v571, 34
        %v574 = vpop.permute.xlu0 %573
        %575 = vrot.lane.b32.xlu0 %v572, 34
        %v576 = vpop.permute.xlu0 %575
        %vm577 = vcmp.lt.s32.totalorder %v296, 34
        %v578 = vsel %vm577, %v574, %v576
        %v579 = vsel %vm577, %v576, %v574
        %vm580 = vmand %vm244, %vm265
        %v581 = vsel %vm580, 1, 0
        %v582 = vcvt.s32.f32 %v581
        %v584 = vlaneseq
        %v585 = vshrl.u32 %v584, 7
        %v586 = vsub.s32 0, %v585
        %v587 = vrot.slane %v582, %v586
        %v588 = vlaneseq
        %v589 = vshrl.u32 %v588, 7
        %v590 = vsub.s32 1, %v589
        %v591 = vrot.slane %v582, %v590
        %v594 = vmul.f32 %v579, %v587
        %v595 = vmul.f32 %v578, %v591
        %v596 = vadd.f32 %v456, %v594
        %v597 = vadd.f32 %v457, %v595
        %s598 = sld [smem:[#allocation6 + $0x9]]
        %v599 = vstv %s598
        %v600 = vmul.f32 %v599, %v220
        %v601 = vmul.f32 %v599, %v221
        %s602 = sld [smem:[#allocation6 + $0x3a]]
        %v603 = vstv %s602
        %v604 = vmul.f32 %v603, %v228
        %v605 = vmul.f32 %v603, %v235
        %v606 = vadd.f32 %v600, %v604
        %v607 = vadd.f32 %v601, %v605
        %608 = vrot.lane.b32.xlu0 %v606, 33
        %v609 = vpop.permute.xlu0 %608
        %610 = vrot.lane.b32.xlu0 %v607, 33
        %v611 = vpop.permute.xlu0 %610
        %vm612 = vcmp.lt.s32.totalorder %v296, 33
        %v613 = vsel %vm612, %v609, %v611
        %v614 = vsel %vm612, %v611, %v609
        %vm615 = vmand %vm244, %vm268
        %v616 = vsel %vm615, 1, 0
        %v617 = vcvt.s32.f32 %v616
        %v619 = vlaneseq
        %v620 = vshrl.u32 %v619, 7
        %v621 = vsub.s32 0, %v620
        %v622 = vrot.slane %v617, %v621
        %v623 = vlaneseq
        %v624 = vshrl.u32 %v623, 7
        %v625 = vsub.s32 1, %v624
        %v626 = vrot.slane %v617, %v625
        %v629 = vmul.f32 %v614, %v622
        %v630 = vmul.f32 %v613, %v626
        %v631 = vadd.f32 %v491, %v629
        %v632 = vadd.f32 %v492, %v630
        %s633 = sld [smem:[#allocation6 + $0xa]]
        %v634 = vstv %s633
        %v635 = vmul.f32 %v634, %v220
        %v636 = vmul.f32 %v634, %v221
        %s637 = sld [smem:[#allocation6 + $0x3b]]
        %v638 = vstv %s637
        %v639 = vmul.f32 %v638, %v228
        %v640 = vmul.f32 %v638, %v235
        %v641 = vadd.f32 %v635, %v639
        %v642 = vadd.f32 %v636, %v640
        %643 = vrot.lane.b32.xlu0 %v641, 32
        %v644 = vpop.permute.xlu0 %643
        %645 = vrot.lane.b32.xlu0 %v642, 32
        %v646 = vpop.permute.xlu0 %645
        %vm647 = vcmp.lt.s32.totalorder %v296, 32
        %v648 = vsel %vm647, %v644, %v646
        %v649 = vsel %vm647, %v646, %v644
        %vm650 = vmand %vm244, %vm271
        %v651 = vsel %vm650, 1, 0
        %v652 = vcvt.s32.f32 %v651
        %v654 = vlaneseq
        %v655 = vshrl.u32 %v654, 7
        %v656 = vsub.s32 0, %v655
        %v657 = vrot.slane %v652, %v656
        %v658 = vlaneseq
        %v659 = vshrl.u32 %v658, 7
        %v660 = vsub.s32 1, %v659
        %v661 = vrot.slane %v652, %v660
        %v664 = vmul.f32 %v649, %v657
        %v665 = vmul.f32 %v648, %v661
        %v666 = vadd.f32 %v526, %v664
        %v667 = vadd.f32 %v527, %v665
        %s668 = sld [smem:[#allocation6 + $0xb]]
        %v669 = vstv %s668
        %v670 = vmul.f32 %v669, %v220
        %v671 = vmul.f32 %v669, %v221
        %s672 = sld [smem:[#allocation6 + $0x3c]]
        %v673 = vstv %s672
        %v674 = vmul.f32 %v673, %v228
        %v675 = vmul.f32 %v673, %v235
        %v676 = vadd.f32 %v670, %v674
        %v677 = vadd.f32 %v671, %v675
        %678 = vrot.lane.b32.xlu0 %v676, 31
        %v679 = vpop.permute.xlu0 %678
        %680 = vrot.lane.b32.xlu0 %v677, 31
        %v681 = vpop.permute.xlu0 %680
        %vm682 = vcmp.lt.s32.totalorder %v296, 31
        %v683 = vsel %vm682, %v679, %v681
        %v684 = vsel %vm682, %v681, %v679
        %vm685 = vmand %vm244, %vm274
        %v686 = vsel %vm685, 1, 0
        %v687 = vcvt.s32.f32 %v686
        %v689 = vlaneseq
        %v690 = vshrl.u32 %v689, 7
        %v691 = vsub.s32 0, %v690
        %v692 = vrot.slane %v687, %v691
        %v693 = vlaneseq
        %v694 = vshrl.u32 %v693, 7
        %v695 = vsub.s32 1, %v694
        %v696 = vrot.slane %v687, %v695
        %v699 = vmul.f32 %v684, %v692
        %v700 = vmul.f32 %v683, %v696
        %v701 = vadd.f32 %v561, %v699
        %v702 = vadd.f32 %v562, %v700
        %s703 = sld [smem:[#allocation6 + $0xc]]
        %v704 = vstv %s703
        %v705 = vmul.f32 %v704, %v220
        %v706 = vmul.f32 %v704, %v221
        %s707 = sld [smem:[#allocation6 + $0x3d]]
        %v708 = vstv %s707
        %v709 = vmul.f32 %v708, %v228
        %v710 = vmul.f32 %v708, %v235
        %v711 = vadd.f32 %v705, %v709
        %v712 = vadd.f32 %v706, %v710
        %713 = vrot.lane.b32.xlu0 %v711, 30
        %v714 = vpop.permute.xlu0 %713
        %715 = vrot.lane.b32.xlu0 %v712, 30
        %v716 = vpop.permute.xlu0 %715
        %vm717 = vcmp.lt.s32.totalorder %v296, 30
        %v718 = vsel %vm717, %v714, %v716
        %v719 = vsel %vm717, %v716, %v714
        %vm720 = vmand %vm244, %vm277
        %v721 = vsel %vm720, 1, 0
        %v722 = vcvt.s32.f32 %v721
        %v724 = vlaneseq
        %v725 = vshrl.u32 %v724, 7
        %v726 = vsub.s32 0, %v725
        %v727 = vrot.slane %v722, %v726
        %v728 = vlaneseq
        %v729 = vshrl.u32 %v728, 7
        %v730 = vsub.s32 1, %v729
        %v731 = vrot.slane %v722, %v730
        %v734 = vmul.f32 %v719, %v727
        %v735 = vmul.f32 %v718, %v731
        %v736 = vadd.f32 %v596, %v734
        %v737 = vadd.f32 %v597, %v735
        %s738 = sld [smem:[#allocation6 + $0xd]]
        %v739 = vstv %s738
        %v740 = vmul.f32 %v739, %v220
        %v741 = vmul.f32 %v739, %v221
        %s742 = sld [smem:[#allocation6 + $0x3e]]
        %v743 = vstv %s742
        %v744 = vmul.f32 %v743, %v228
        %v745 = vmul.f32 %v743, %v235
        %v746 = vadd.f32 %v740, %v744
        %v747 = vadd.f32 %v741, %v745
        %748 = vrot.lane.b32.xlu0 %v746, 29
        %v749 = vpop.permute.xlu0 %748
        %750 = vrot.lane.b32.xlu0 %v747, 29
        %v751 = vpop.permute.xlu0 %750
        %vm752 = vcmp.lt.s32.totalorder %v296, 29
        %v753 = vsel %vm752, %v749, %v751
        %v754 = vsel %vm752, %v751, %v749
        %vm755 = vmand %vm244, %vm280
        %v756 = vsel %vm755, 1, 0
        %v757 = vcvt.s32.f32 %v756
        %v759 = vlaneseq
        %v760 = vshrl.u32 %v759, 7
        %v761 = vsub.s32 0, %v760
        %v762 = vrot.slane %v757, %v761
        %v763 = vlaneseq
        %v764 = vshrl.u32 %v763, 7
        %v765 = vsub.s32 1, %v764
        %v766 = vrot.slane %v757, %v765
        %v769 = vmul.f32 %v754, %v762
        %v770 = vmul.f32 %v753, %v766
        %v771 = vadd.f32 %v631, %v769
        %v772 = vadd.f32 %v632, %v770
        %s773 = sld [smem:[#allocation6 + $0xe]]
        %v774 = vstv %s773
        %v775 = vmul.f32 %v774, %v220
        %v776 = vmul.f32 %v774, %v221
        %s777 = sld [smem:[#allocation6 + $0x3f]]
        %v778 = vstv %s777
        %v779 = vmul.f32 %v778, %v228
        %v780 = vmul.f32 %v778, %v235
        %v781 = vadd.f32 %v775, %v779
        %v782 = vadd.f32 %v776, %v780
        %783 = vrot.lane.b32.xlu0 %v781, 19
        %v784 = vpop.permute.xlu0 %783
        %785 = vrot.lane.b32.xlu0 %v782, 19
        %v786 = vpop.permute.xlu0 %785
        %vm787 = vcmp.lt.s32.totalorder %v296, 19
        %v788 = vsel %vm787, %v784, %v786
        %v789 = vsel %vm787, %v786, %v784
        %vm790 = vmand %vm247, %vm262
        %v791 = vsel %vm790, 1, 0
        %v792 = vcvt.s32.f32 %v791
        %v794 = vlaneseq
        %v795 = vshrl.u32 %v794, 7
        %v796 = vsub.s32 0, %v795
        %v797 = vrot.slane %v792, %v796
        %v798 = vlaneseq
        %v799 = vshrl.u32 %v798, 7
        %v800 = vsub.s32 1, %v799
        %v801 = vrot.slane %v792, %v800
        %v804 = vmul.f32 %v789, %v797
        %v805 = vmul.f32 %v788, %v801
        %v806 = vadd.f32 %v666, %v804
        %v807 = vadd.f32 %v667, %v805
        %s808 = sld [smem:[#allocation6 + $0xf]]
        %v809 = vstv %s808
        %v810 = vmul.f32 %v809, %v220
        %v811 = vmul.f32 %v809, %v221
        %s812 = sld [smem:[#allocation6 + $0x40]]
        %v813 = vstv %s812
        %v814 = vmul.f32 %v813, %v228
        %v815 = vmul.f32 %v813, %v235
        %v816 = vadd.f32 %v810, %v814
        %v817 = vadd.f32 %v811, %v815
        %818 = vrot.lane.b32.xlu0 %v816, 18
        %v819 = vpop.permute.xlu0 %818
        %820 = vrot.lane.b32.xlu0 %v817, 18
        %v821 = vpop.permute.xlu0 %820
        %vm822 = vcmp.lt.s32.totalorder %v296, 18
        %v823 = vsel %vm822, %v819, %v821
        %v824 = vsel %vm822, %v821, %v819
        %vm825 = vmand %vm247, %vm265
        %v826 = vsel %vm825, 1, 0
        %v827 = vcvt.s32.f32 %v826
        %v829 = vlaneseq
        %v830 = vshrl.u32 %v829, 7
        %v831 = vsub.s32 0, %v830
        %v832 = vrot.slane %v827, %v831
        %v833 = vlaneseq
        %v834 = vshrl.u32 %v833, 7
        %v835 = vsub.s32 1, %v834
        %v836 = vrot.slane %v827, %v835
        %v839 = vmul.f32 %v824, %v832
        %v840 = vmul.f32 %v823, %v836
        %v841 = vadd.f32 %v701, %v839
        %v842 = vadd.f32 %v702, %v840
        %s843 = sld [smem:[#allocation6 + $0x10]]
        %v844 = vstv %s843
        %v845 = vmul.f32 %v844, %v220
        %v846 = vmul.f32 %v844, %v221
        %s847 = sld [smem:[#allocation6 + $0x41]]
        %v848 = vstv %s847
        %v849 = vmul.f32 %v848, %v228
        %v850 = vmul.f32 %v848, %v235
        %v851 = vadd.f32 %v845, %v849
        %v852 = vadd.f32 %v846, %v850
        %853 = vrot.lane.b32.xlu0 %v851, 17
        %v854 = vpop.permute.xlu0 %853
        %855 = vrot.lane.b32.xlu0 %v852, 17
        %v856 = vpop.permute.xlu0 %855
        %vm857 = vcmp.lt.s32.totalorder %v296, 17
        %v858 = vsel %vm857, %v854, %v856
        %v859 = vsel %vm857, %v856, %v854
        %vm860 = vmand %vm247, %vm268
        %v861 = vsel %vm860, 1, 0
        %v862 = vcvt.s32.f32 %v861
        %v864 = vlaneseq
        %v865 = vshrl.u32 %v864, 7
        %v866 = vsub.s32 0, %v865
        %v867 = vrot.slane %v862, %v866
        %v868 = vlaneseq
        %v869 = vshrl.u32 %v868, 7
        %v870 = vsub.s32 1, %v869
        %v871 = vrot.slane %v862, %v870
        %v874 = vmul.f32 %v859, %v867
        %v875 = vmul.f32 %v858, %v871
        %v876 = vadd.f32 %v736, %v874
        %v877 = vadd.f32 %v737, %v875
        %s878 = sld [smem:[#allocation6 + $0x11]]
        %v879 = vstv %s878
        %v880 = vmul.f32 %v879, %v220
        %v881 = vmul.f32 %v879, %v221
        %s882 = sld [smem:[#allocation6 + $0x42]]
        %v883 = vstv %s882
        %v884 = vmul.f32 %v883, %v228
        %v885 = vmul.f32 %v883, %v235
        %v886 = vadd.f32 %v880, %v884
        %v887 = vadd.f32 %v881, %v885
        %888 = vrot.lane.b32.xlu0 %v886, 16
        %v889 = vpop.permute.xlu0 %888
        %890 = vrot.lane.b32.xlu0 %v887, 16
        %v891 = vpop.permute.xlu0 %890
        %vm892 = vcmp.lt.s32.totalorder %v296, 16
        %v893 = vsel %vm892, %v889, %v891
        %v894 = vsel %vm892, %v891, %v889
        %vm895 = vmand %vm247, %vm271
        %v896 = vsel %vm895, 1, 0
        %v897 = vcvt.s32.f32 %v896
        %v899 = vlaneseq
        %v900 = vshrl.u32 %v899, 7
        %v901 = vsub.s32 0, %v900
        %v902 = vrot.slane %v897, %v901
        %v903 = vlaneseq
        %v904 = vshrl.u32 %v903, 7
        %v905 = vsub.s32 1, %v904
        %v906 = vrot.slane %v897, %v905
        %v909 = vmul.f32 %v894, %v902
        %v910 = vmul.f32 %v893, %v906
        %v911 = vadd.f32 %v771, %v909
        %v912 = vadd.f32 %v772, %v910
        %s913 = sld [smem:[#allocation6 + $0x12]]
        %v914 = vstv %s913
        %v915 = vmul.f32 %v914, %v220
        %v916 = vmul.f32 %v914, %v221
        %s917 = sld [smem:[#allocation6 + $0x43]]
        %v918 = vstv %s917
        %v919 = vmul.f32 %v918, %v228
        %v920 = vmul.f32 %v918, %v235
        %v921 = vadd.f32 %v915, %v919
        %v922 = vadd.f32 %v916, %v920
        %923 = vrot.lane.b32.xlu0 %v921, 15
        %v924 = vpop.permute.xlu0 %923
        %925 = vrot.lane.b32.xlu0 %v922, 15
        %v926 = vpop.permute.xlu0 %925
        %vm927 = vcmp.lt.s32.totalorder %v296, 15
        %v928 = vsel %vm927, %v924, %v926
        %v929 = vsel %vm927, %v926, %v924
        %vm930 = vmand %vm247, %vm274
        %v931 = vsel %vm930, 1, 0
        %v932 = vcvt.s32.f32 %v931
        %v934 = vlaneseq
        %v935 = vshrl.u32 %v934, 7
        %v936 = vsub.s32 0, %v935
        %v937 = vrot.slane %v932, %v936
        %v938 = vlaneseq
        %v939 = vshrl.u32 %v938, 7
        %v940 = vsub.s32 1, %v939
        %v941 = vrot.slane %v932, %v940
        %v944 = vmul.f32 %v929, %v937
        %v945 = vmul.f32 %v928, %v941
        %v946 = vadd.f32 %v806, %v944
        %v947 = vadd.f32 %v807, %v945
        %s948 = sld [smem:[#allocation6 + $0x13]]
        %v949 = vstv %s948
        %v950 = vmul.f32 %v949, %v220
        %v951 = vmul.f32 %v949, %v221
        %s952 = sld [smem:[#allocation6 + $0x44]]
        %v953 = vstv %s952
        %v954 = vmul.f32 %v953, %v228
        %v955 = vmul.f32 %v953, %v235
        %v956 = vadd.f32 %v950, %v954
        %v957 = vadd.f32 %v951, %v955
        %958 = vrot.lane.b32.xlu0 %v956, 14
        %v959 = vpop.permute.xlu0 %958
        %960 = vrot.lane.b32.xlu0 %v957, 14
        %v961 = vpop.permute.xlu0 %960
        %vm962 = vcmp.lt.s32.totalorder %v296, 14
        %v963 = vsel %vm962, %v959, %v961
        %v964 = vsel %vm962, %v961, %v959
        %vm965 = vmand %vm247, %vm277
        %v966 = vsel %vm965, 1, 0
        %v967 = vcvt.s32.f32 %v966
        %v969 = vlaneseq
        %v970 = vshrl.u32 %v969, 7
        %v971 = vsub.s32 0, %v970
        %v972 = vrot.slane %v967, %v971
        %v973 = vlaneseq
        %v974 = vshrl.u32 %v973, 7
        %v975 = vsub.s32 1, %v974
        %v976 = vrot.slane %v967, %v975
        %v979 = vmul.f32 %v964, %v972
        %v980 = vmul.f32 %v963, %v976
        %v981 = vadd.f32 %v841, %v979
        %v982 = vadd.f32 %v842, %v980
        %s983 = sld [smem:[#allocation6 + $0x14]]
        %v984 = vstv %s983
        %v985 = vmul.f32 %v984, %v220
        %v986 = vmul.f32 %v984, %v221
        %s987 = sld [smem:[#allocation6 + $0x45]]
        %v988 = vstv %s987
        %v989 = vmul.f32 %v988, %v228
        %v990 = vmul.f32 %v988, %v235
        %v991 = vadd.f32 %v985, %v989
        %v992 = vadd.f32 %v986, %v990
        %993 = vrot.lane.b32.xlu0 %v991, 13
        %v994 = vpop.permute.xlu0 %993
        %995 = vrot.lane.b32.xlu0 %v992, 13
        %v996 = vpop.permute.xlu0 %995
        %vm997 = vcmp.lt.s32.totalorder %v296, 13
        %v998 = vsel %vm997, %v994, %v996
        %v999 = vsel %vm997, %v996, %v994
        %vm1000 = vmand %vm247, %vm280
        %v1001 = vsel %vm1000, 1, 0
        %v1002 = vcvt.s32.f32 %v1001
        %v1004 = vlaneseq
        %v1005 = vshrl.u32 %v1004, 7
        %v1006 = vsub.s32 0, %v1005
        %v1007 = vrot.slane %v1002, %v1006
        %v1008 = vlaneseq
        %v1009 = vshrl.u32 %v1008, 7
        %v1010 = vsub.s32 1, %v1009
        %v1011 = vrot.slane %v1002, %v1010
        %v1014 = vmul.f32 %v999, %v1007
        %v1015 = vmul.f32 %v998, %v1011
        %v1016 = vadd.f32 %v876, %v1014
        %v1017 = vadd.f32 %v877, %v1015
        %s1018 = sld [smem:[#allocation6 + $0x15]]
        %v1019 = vstv %s1018
        %v1020 = vmul.f32 %v1019, %v220
        %v1021 = vmul.f32 %v1019, %v221
        %s1022 = sld [smem:[#allocation6 + $0x46]]
        %v1023 = vstv %s1022
        %v1024 = vmul.f32 %v1023, %v228
        %v1025 = vmul.f32 %v1023, %v235
        %v1026 = vadd.f32 %v1020, %v1024
        %v1027 = vadd.f32 %v1021, %v1025
        %1028 = vrot.lane.b32.xlu0 %v1026, 3
        %v1029 = vpop.permute.xlu0 %1028
        %1030 = vrot.lane.b32.xlu0 %v1027, 3
        %v1031 = vpop.permute.xlu0 %1030
        %vm1032 = vcmp.lt.s32.totalorder %v296, 3
        %v1033 = vsel %vm1032, %v1029, %v1031
        %v1034 = vsel %vm1032, %v1031, %v1029
        %vm1035 = vmand %vm250, %vm262
        %v1036 = vsel %vm1035, 1, 0
        %v1037 = vcvt.s32.f32 %v1036
        %v1039 = vlaneseq
        %v1040 = vshrl.u32 %v1039, 7
        %v1041 = vsub.s32 0, %v1040
        %v1042 = vrot.slane %v1037, %v1041
        %v1043 = vlaneseq
        %v1044 = vshrl.u32 %v1043, 7
        %v1045 = vsub.s32 1, %v1044
        %v1046 = vrot.slane %v1037, %v1045
        %v1049 = vmul.f32 %v1034, %v1042
        %v1050 = vmul.f32 %v1033, %v1046
        %v1051 = vadd.f32 %v911, %v1049
        %v1052 = vadd.f32 %v912, %v1050
        %s1053 = sld [smem:[#allocation6 + $0x16]]
        %v1054 = vstv %s1053
        %v1055 = vmul.f32 %v1054, %v220
        %v1056 = vmul.f32 %v1054, %v221
        %s1057 = sld [smem:[#allocation6 + $0x47]]
        %v1058 = vstv %s1057
        %v1059 = vmul.f32 %v1058, %v228
        %v1060 = vmul.f32 %v1058, %v235
        %v1061 = vadd.f32 %v1055, %v1059
        %v1062 = vadd.f32 %v1056, %v1060
        %1063 = vrot.lane.b32.xlu0 %v1061, 2
        %v1064 = vpop.permute.xlu0 %1063
        %1065 = vrot.lane.b32.xlu0 %v1062, 2
        %v1066 = vpop.permute.xlu0 %1065
        %vm1067 = vcmp.lt.s32.totalorder %v296, 2
        %v1068 = vsel %vm1067, %v1064, %v1066
        %v1069 = vsel %vm1067, %v1066, %v1064
        %vm1070 = vmand %vm250, %vm265
        %v1071 = vsel %vm1070, 1, 0
        %v1072 = vcvt.s32.f32 %v1071
        %v1074 = vlaneseq
        %v1075 = vshrl.u32 %v1074, 7
        %v1076 = vsub.s32 0, %v1075
        %v1077 = vrot.slane %v1072, %v1076
        %v1078 = vlaneseq
        %v1079 = vshrl.u32 %v1078, 7
        %v1080 = vsub.s32 1, %v1079
        %v1081 = vrot.slane %v1072, %v1080
        %v1084 = vmul.f32 %v1069, %v1077
        %v1085 = vmul.f32 %v1068, %v1081
        %v1086 = vadd.f32 %v946, %v1084
        %v1087 = vadd.f32 %v947, %v1085
        %s1088 = sld [smem:[#allocation6 + $0x17]]
        %v1089 = vstv %s1088
        %v1090 = vmul.f32 %v1089, %v220
        %v1091 = vmul.f32 %v1089, %v221
        %s1092 = sld [smem:[#allocation6 + $0x48]]
        %v1093 = vstv %s1092
        %v1094 = vmul.f32 %v1093, %v228
        %v1095 = vmul.f32 %v1093, %v235
        %v1096 = vadd.f32 %v1090, %v1094
        %v1097 = vadd.f32 %v1091, %v1095
        %1098 = vrot.lane.b32.xlu0 %v1096, 1
        %v1099 = vpop.permute.xlu0 %1098
        %1100 = vrot.lane.b32.xlu0 %v1097, 1
        %v1101 = vpop.permute.xlu0 %1100
        %vm1102 = vcmp.lt.s32.totalorder %v296, 1
        %v1103 = vsel %vm1102, %v1099, %v1101
        %v1104 = vsel %vm1102, %v1101, %v1099
        %vm1105 = vmand %vm250, %vm268
        %v1106 = vsel %vm1105, 1, 0
        %v1107 = vcvt.s32.f32 %v1106
        %v1109 = vlaneseq
        %v1110 = vshrl.u32 %v1109, 7
        %v1111 = vsub.s32 0, %v1110
        %v1112 = vrot.slane %v1107, %v1111
        %v1113 = vlaneseq
        %v1114 = vshrl.u32 %v1113, 7
        %v1115 = vsub.s32 1, %v1114
        %v1116 = vrot.slane %v1107, %v1115
        %v1119 = vmul.f32 %v1104, %v1112
        %v1120 = vmul.f32 %v1103, %v1116
        %v1121 = vadd.f32 %v981, %v1119
        %v1122 = vadd.f32 %v982, %v1120
        %s1123 = sld [smem:[#allocation6 + $0x18]]
        %v1124 = vstv %s1123
        %v1125 = vmul.f32 %v1124, %v220
        %v1126 = vmul.f32 %v1124, %v221
        %s1127 = sld [smem:[#allocation6 + $0x49]]
        %v1128 = vstv %s1127
        %v1129 = vmul.f32 %v1128, %v228
        %v1130 = vmul.f32 %v1128, %v235
        %v1131 = vadd.f32 %v1125, %v1129
        %v1132 = vadd.f32 %v1126, %v1130
        %vm1133 = vmand %vm250, %vm271
        %v1134 = vsel %vm1133, 1, 0
        %v1135 = vcvt.s32.f32 %v1134
        %v1137 = vlaneseq
        %v1138 = vshrl.u32 %v1137, 7
        %v1139 = vsub.s32 0, %v1138
        %v1140 = vrot.slane %v1135, %v1139
        %v1141 = vlaneseq
        %v1142 = vshrl.u32 %v1141, 7
        %v1143 = vsub.s32 1, %v1142
        %v1144 = vrot.slane %v1135, %v1143
        %v1147 = vmul.f32 %v1131, %v1140
        %v1148 = vmul.f32 %v1132, %v1144
        %v1149 = vadd.f32 %v1016, %v1147
        %v1150 = vadd.f32 %v1017, %v1148
        %s1151 = sld [smem:[#allocation6 + $0x19]]
        %v1152 = vstv %s1151
        %v1153 = vmul.f32 %v1152, %v220
        %v1154 = vmul.f32 %v1152, %v221
        %s1155 = sld [smem:[#allocation6 + $0x4a]]
        %v1156 = vstv %s1155
        %v1157 = vmul.f32 %v1156, %v228
        %v1158 = vmul.f32 %v1156, %v235
        %v1159 = vadd.f32 %v1153, %v1157
        %v1160 = vadd.f32 %v1154, %v1158
        %1161 = vrot.lane.b32.xlu0 %v1159, 127
        %v1162 = vpop.permute.xlu0 %1161
        %1163 = vrot.lane.b32.xlu0 %v1160, 127
        %v1164 = vpop.permute.xlu0 %1163
        %vm1165 = vcmp.lt.s32.totalorder %v296, 127
        %v1166 = vsel %vm1165, %v1162, %v1164
        %v1167 = vsel %vm1165, %v1164, %v1162
        %vm1168 = vmand %vm250, %vm274
        %v1169 = vsel %vm1168, 1, 0
        %v1170 = vcvt.s32.f32 %v1169
        %v1172 = vlaneseq
        %v1173 = vshrl.u32 %v1172, 7
        %v1174 = vsub.s32 0, %v1173
        %v1175 = vrot.slane %v1170, %v1174
        %v1176 = vlaneseq
        %v1177 = vshrl.u32 %v1176, 7
        %v1178 = vsub.s32 1, %v1177
        %v1179 = vrot.slane %v1170, %v1178
        %v1182 = vmul.f32 %v1166, %v1175
        %v1183 = vmul.f32 %v1167, %v1179
        %v1184 = vadd.f32 %v1051, %v1182
        %v1185 = vadd.f32 %v1052, %v1183
        %s1186 = sld [smem:[#allocation6 + $0x1a]]
        %v1187 = vstv %s1186
        %v1188 = vmul.f32 %v1187, %v220
        %v1189 = vmul.f32 %v1187, %v221
        %s1190 = sld [smem:[#allocation6 + $0x4b]]
        %v1191 = vstv %s1190
        %v1192 = vmul.f32 %v1191, %v228
        %v1193 = vmul.f32 %v1191, %v235
        %v1194 = vadd.f32 %v1188, %v1192
        %v1195 = vadd.f32 %v1189, %v1193
        %1196 = vrot.lane.b32.xlu0 %v1194, 126
        %v1197 = vpop.permute.xlu0 %1196
        %1198 = vrot.lane.b32.xlu0 %v1195, 126
        %v1199 = vpop.permute.xlu0 %1198
        %vm1200 = vcmp.lt.s32.totalorder %v296, 126
        %v1201 = vsel %vm1200, %v1197, %v1199
        %v1202 = vsel %vm1200, %v1199, %v1197
        %vm1203 = vmand %vm250, %vm277
        %v1204 = vsel %vm1203, 1, 0
        %v1205 = vcvt.s32.f32 %v1204
        %v1207 = vlaneseq
        %v1208 = vshrl.u32 %v1207, 7
        %v1209 = vsub.s32 0, %v1208
        %v1210 = vrot.slane %v1205, %v1209
        %v1211 = vlaneseq
        %v1212 = vshrl.u32 %v1211, 7
        %v1213 = vsub.s32 1, %v1212
        %v1214 = vrot.slane %v1205, %v1213
        %v1217 = vmul.f32 %v1201, %v1210
        %v1218 = vmul.f32 %v1202, %v1214
        %v1219 = vadd.f32 %v1086, %v1217
        %v1220 = vadd.f32 %v1087, %v1218
        %s1221 = sld [smem:[#allocation6 + $0x1b]]
        %v1222 = vstv %s1221
        %v1223 = vmul.f32 %v1222, %v220
        %v1224 = vmul.f32 %v1222, %v221
        %s1225 = sld [smem:[#allocation6 + $0x4c]]
        %v1226 = vstv %s1225
        %v1227 = vmul.f32 %v1226, %v228
        %v1228 = vmul.f32 %v1226, %v235
        %v1229 = vadd.f32 %v1223, %v1227
        %v1230 = vadd.f32 %v1224, %v1228
        %1231 = vrot.lane.b32.xlu0 %v1229, 125
        %v1232 = vpop.permute.xlu0 %1231
        %1233 = vrot.lane.b32.xlu0 %v1230, 125
        %v1234 = vpop.permute.xlu0 %1233
        %vm1235 = vcmp.lt.s32.totalorder %v296, 125
        %v1236 = vsel %vm1235, %v1232, %v1234
        %v1237 = vsel %vm1235, %v1234, %v1232
        %vm1238 = vmand %vm250, %vm280
        %v1239 = vsel %vm1238, 1, 0
        %v1240 = vcvt.s32.f32 %v1239
        %v1242 = vlaneseq
        %v1243 = vshrl.u32 %v1242, 7
        %v1244 = vsub.s32 0, %v1243
        %v1245 = vrot.slane %v1240, %v1244
        %v1246 = vlaneseq
        %v1247 = vshrl.u32 %v1246, 7
        %v1248 = vsub.s32 1, %v1247
        %v1249 = vrot.slane %v1240, %v1248
        %v1252 = vmul.f32 %v1236, %v1245
        %v1253 = vmul.f32 %v1237, %v1249
        %v1254 = vadd.f32 %v1121, %v1252
        %v1255 = vadd.f32 %v1122, %v1253
        %s1256 = sld [smem:[#allocation6 + $0x1c]]
        %v1257 = vstv %s1256
        %v1258 = vmul.f32 %v1257, %v220
        %v1259 = vmul.f32 %v1257, %v221
        %s1260 = sld [smem:[#allocation6 + $0x4d]]
        %v1261 = vstv %s1260
        %v1262 = vmul.f32 %v1261, %v228
        %v1263 = vmul.f32 %v1261, %v235
        %v1264 = vadd.f32 %v1258, %v1262
        %v1265 = vadd.f32 %v1259, %v1263
        %1266 = vrot.lane.b32.xlu0 %v1264, 115
        %v1267 = vpop.permute.xlu0 %1266
        %1268 = vrot.lane.b32.xlu0 %v1265, 115
        %v1269 = vpop.permute.xlu0 %1268
        %vm1270 = vcmp.lt.s32.totalorder %v296, 115
        %v1271 = vsel %vm1270, %v1267, %v1269
        %v1272 = vsel %vm1270, %v1269, %v1267
        %vm1273 = vmand %vm253, %vm262
        %v1274 = vsel %vm1273, 1, 0
        %v1275 = vcvt.s32.f32 %v1274
        %v1277 = vlaneseq
        %v1278 = vshrl.u32 %v1277, 7
        %v1279 = vsub.s32 0, %v1278
        %v1280 = vrot.slane %v1275, %v1279
        %v1281 = vlaneseq
        %v1282 = vshrl.u32 %v1281, 7
        %v1283 = vsub.s32 1, %v1282
        %v1284 = vrot.slane %v1275, %v1283
        %v1287 = vmul.f32 %v1271, %v1280
        %v1288 = vmul.f32 %v1272, %v1284
        %v1289 = vadd.f32 %v1149, %v1287
        %v1290 = vadd.f32 %v1150, %v1288
        %s1291 = sld [smem:[#allocation6 + $0x1d]]
        %v1292 = vstv %s1291
        %v1293 = vmul.f32 %v1292, %v220
        %v1294 = vmul.f32 %v1292, %v221
        %s1295 = sld [smem:[#allocation6 + $0x4e]]
        %v1296 = vstv %s1295
        %v1297 = vmul.f32 %v1296, %v228
        %v1298 = vmul.f32 %v1296, %v235
        %v1299 = vadd.f32 %v1293, %v1297
        %v1300 = vadd.f32 %v1294, %v1298
        %1301 = vrot.lane.b32.xlu0 %v1299, 114
        %v1302 = vpop.permute.xlu0 %1301
        %1303 = vrot.lane.b32.xlu0 %v1300, 114
        %v1304 = vpop.permute.xlu0 %1303
        %vm1305 = vcmp.lt.s32.totalorder %v296, 114
        %v1306 = vsel %vm1305, %v1302, %v1304
        %v1307 = vsel %vm1305, %v1304, %v1302
        %vm1308 = vmand %vm253, %vm265
        %v1309 = vsel %vm1308, 1, 0
        %v1310 = vcvt.s32.f32 %v1309
        %v1312 = vlaneseq
        %v1313 = vshrl.u32 %v1312, 7
        %v1314 = vsub.s32 0, %v1313
        %v1315 = vrot.slane %v1310, %v1314
        %v1316 = vlaneseq
        %v1317 = vshrl.u32 %v1316, 7
        %v1318 = vsub.s32 1, %v1317
        %v1319 = vrot.slane %v1310, %v1318
        %v1322 = vmul.f32 %v1306, %v1315
        %v1323 = vmul.f32 %v1307, %v1319
        %v1324 = vadd.f32 %v1184, %v1322
        %v1325 = vadd.f32 %v1185, %v1323
        %s1326 = sld [smem:[#allocation6 + $0x1e]]
        %v1327 = vstv %s1326
        %v1328 = vmul.f32 %v1327, %v220
        %v1329 = vmul.f32 %v1327, %v221
        %s1330 = sld [smem:[#allocation6 + $0x4f]]
        %v1331 = vstv %s1330
        %v1332 = vmul.f32 %v1331, %v228
        %v1333 = vmul.f32 %v1331, %v235
        %v1334 = vadd.f32 %v1328, %v1332
        %v1335 = vadd.f32 %v1329, %v1333
        %1336 = vrot.lane.b32.xlu0 %v1334, 113
        %v1337 = vpop.permute.xlu0 %1336
        %1338 = vrot.lane.b32.xlu0 %v1335, 113
        %v1339 = vpop.permute.xlu0 %1338
        %vm1340 = vcmp.lt.s32.totalorder %v296, 113
        %v1341 = vsel %vm1340, %v1337, %v1339
        %v1342 = vsel %vm1340, %v1339, %v1337
        %vm1343 = vmand %vm253, %vm268
        %v1344 = vsel %vm1343, 1, 0
        %v1345 = vcvt.s32.f32 %v1344
        %v1347 = vlaneseq
        %v1348 = vshrl.u32 %v1347, 7
        %v1349 = vsub.s32 0, %v1348
        %v1350 = vrot.slane %v1345, %v1349
        %v1351 = vlaneseq
        %v1352 = vshrl.u32 %v1351, 7
        %v1353 = vsub.s32 1, %v1352
        %v1354 = vrot.slane %v1345, %v1353
        %v1357 = vmul.f32 %v1341, %v1350
        %v1358 = vmul.f32 %v1342, %v1354
        %v1359 = vadd.f32 %v1219, %v1357
        %v1360 = vadd.f32 %v1220, %v1358
        %s1361 = sld [smem:[#allocation6 + $0x1f]]
        %v1362 = vstv %s1361
        %v1363 = vmul.f32 %v1362, %v220
        %v1364 = vmul.f32 %v1362, %v221
        %s1365 = sld [smem:[#allocation6 + $0x50]]
        %v1366 = vstv %s1365
        %v1367 = vmul.f32 %v1366, %v228
        %v1368 = vmul.f32 %v1366, %v235
        %v1369 = vadd.f32 %v1363, %v1367
        %v1370 = vadd.f32 %v1364, %v1368
        %1371 = vrot.lane.b32.xlu0 %v1369, 112
        %v1372 = vpop.permute.xlu0 %1371
        %1373 = vrot.lane.b32.xlu0 %v1370, 112
        %v1374 = vpop.permute.xlu0 %1373
        %vm1375 = vcmp.lt.s32.totalorder %v296, 112
        %v1376 = vsel %vm1375, %v1372, %v1374
        %v1377 = vsel %vm1375, %v1374, %v1372
        %vm1378 = vmand %vm253, %vm271
        %v1379 = vsel %vm1378, 1, 0
        %v1380 = vcvt.s32.f32 %v1379
        %v1382 = vlaneseq
        %v1383 = vshrl.u32 %v1382, 7
        %v1384 = vsub.s32 0, %v1383
        %v1385 = vrot.slane %v1380, %v1384
        %v1386 = vlaneseq
        %v1387 = vshrl.u32 %v1386, 7
        %v1388 = vsub.s32 1, %v1387
        %v1389 = vrot.slane %v1380, %v1388
        %v1392 = vmul.f32 %v1376, %v1385
        %v1393 = vmul.f32 %v1377, %v1389
        %v1394 = vadd.f32 %v1254, %v1392
        %v1395 = vadd.f32 %v1255, %v1393
        %s1396 = sld [smem:[#allocation6 + $0x20]]
        %v1397 = vstv %s1396
        %v1398 = vmul.f32 %v1397, %v220
        %v1399 = vmul.f32 %v1397, %v221
        %s1400 = sld [smem:[#allocation6 + $0x51]]
        %v1401 = vstv %s1400
        %v1402 = vmul.f32 %v1401, %v228
        %v1403 = vmul.f32 %v1401, %v235
        %v1404 = vadd.f32 %v1398, %v1402
        %v1405 = vadd.f32 %v1399, %v1403
        %1406 = vrot.lane.b32.xlu0 %v1404, 111
        %v1407 = vpop.permute.xlu0 %1406
        %1408 = vrot.lane.b32.xlu0 %v1405, 111
        %v1409 = vpop.permute.xlu0 %1408
        %vm1410 = vcmp.lt.s32.totalorder %v296, 111
        %v1411 = vsel %vm1410, %v1407, %v1409
        %v1412 = vsel %vm1410, %v1409, %v1407
        %vm1413 = vmand %vm253, %vm274
        %v1414 = vsel %vm1413, 1, 0
        %v1415 = vcvt.s32.f32 %v1414
        %v1417 = vlaneseq
        %v1418 = vshrl.u32 %v1417, 7
        %v1419 = vsub.s32 0, %v1418
        %v1420 = vrot.slane %v1415, %v1419
        %v1421 = vlaneseq
        %v1422 = vshrl.u32 %v1421, 7
        %v1423 = vsub.s32 1, %v1422
        %v1424 = vrot.slane %v1415, %v1423
        %v1427 = vmul.f32 %v1411, %v1420
        %v1428 = vmul.f32 %v1412, %v1424
        %v1429 = vadd.f32 %v1289, %v1427
        %v1430 = vadd.f32 %v1290, %v1428
        %s1431 = sld [smem:[#allocation6 + $0x21]]
        %v1432 = vstv %s1431
        %v1433 = vmul.f32 %v1432, %v220
        %v1434 = vmul.f32 %v1432, %v221
        %s1435 = sld [smem:[#allocation6 + $0x52]]
        %v1436 = vstv %s1435
        %v1437 = vmul.f32 %v1436, %v228
        %v1438 = vmul.f32 %v1436, %v235
        %v1439 = vadd.f32 %v1433, %v1437
        %v1440 = vadd.f32 %v1434, %v1438
        %1441 = vrot.lane.b32.xlu0 %v1439, 110
        %v1442 = vpop.permute.xlu0 %1441
        %1443 = vrot.lane.b32.xlu0 %v1440, 110
        %v1444 = vpop.permute.xlu0 %1443
        %vm1445 = vcmp.lt.s32.totalorder %v296, 110
        %v1446 = vsel %vm1445, %v1442, %v1444
        %v1447 = vsel %vm1445, %v1444, %v1442
        %vm1448 = vmand %vm253, %vm277
        %v1449 = vsel %vm1448, 1, 0
        %v1450 = vcvt.s32.f32 %v1449
        %v1452 = vlaneseq
        %v1453 = vshrl.u32 %v1452, 7
        %v1454 = vsub.s32 0, %v1453
        %v1455 = vrot.slane %v1450, %v1454
        %v1456 = vlaneseq
        %v1457 = vshrl.u32 %v1456, 7
        %v1458 = vsub.s32 1, %v1457
        %v1459 = vrot.slane %v1450, %v1458
        %v1462 = vmul.f32 %v1446, %v1455
        %v1463 = vmul.f32 %v1447, %v1459
        %v1464 = vadd.f32 %v1324, %v1462
        %v1465 = vadd.f32 %v1325, %v1463
        %s1466 = sld [smem:[#allocation6 + $0x22]]
        %v1467 = vstv %s1466
        %v1468 = vmul.f32 %v1467, %v220
        %v1469 = vmul.f32 %v1467, %v221
        %s1470 = sld [smem:[#allocation6 + $0x53]]
        %v1471 = vstv %s1470
        %v1472 = vmul.f32 %v1471, %v228
        %v1473 = vmul.f32 %v1471, %v235
        %v1474 = vadd.f32 %v1468, %v1472
        %v1475 = vadd.f32 %v1469, %v1473
        %1476 = vrot.lane.b32.xlu0 %v1474, 109
        %v1477 = vpop.permute.xlu0 %1476
        %1478 = vrot.lane.b32.xlu0 %v1475, 109
        %v1479 = vpop.permute.xlu0 %1478
        %vm1480 = vcmp.lt.s32.totalorder %v296, 109
        %v1481 = vsel %vm1480, %v1477, %v1479
        %v1482 = vsel %vm1480, %v1479, %v1477
        %vm1483 = vmand %vm253, %vm280
        %v1484 = vsel %vm1483, 1, 0
        %v1485 = vcvt.s32.f32 %v1484
        %v1487 = vlaneseq
        %v1488 = vshrl.u32 %v1487, 7
        %v1489 = vsub.s32 0, %v1488
        %v1490 = vrot.slane %v1485, %v1489
        %v1491 = vlaneseq
        %v1492 = vshrl.u32 %v1491, 7
        %v1493 = vsub.s32 1, %v1492
        %v1494 = vrot.slane %v1485, %v1493
        %v1497 = vmul.f32 %v1481, %v1490
        %v1498 = vmul.f32 %v1482, %v1494
        %v1499 = vadd.f32 %v1359, %v1497
        %v1500 = vadd.f32 %v1360, %v1498
        %s1501 = sld [smem:[#allocation6 + $0x23]]
        %v1502 = vstv %s1501
        %v1503 = vmul.f32 %v1502, %v220
        %v1504 = vmul.f32 %v1502, %v221
        %s1505 = sld [smem:[#allocation6 + $0x54]]
        %v1506 = vstv %s1505
        %v1507 = vmul.f32 %v1506, %v228
        %v1508 = vmul.f32 %v1506, %v235
        %v1509 = vadd.f32 %v1503, %v1507
        %v1510 = vadd.f32 %v1504, %v1508
        %1511 = vrot.lane.b32.xlu0 %v1509, 99
        %v1512 = vpop.permute.xlu0 %1511
        %1513 = vrot.lane.b32.xlu0 %v1510, 99
        %v1514 = vpop.permute.xlu0 %1513
        %vm1515 = vcmp.lt.s32.totalorder %v296, 99
        %v1516 = vsel %vm1515, %v1512, %v1514
        %v1517 = vsel %vm1515, %v1514, %v1512
        %vm1518 = vmand %vm256, %vm262
        %v1519 = vsel %vm1518, 1, 0
        %v1520 = vcvt.s32.f32 %v1519
        %v1522 = vlaneseq
        %v1523 = vshrl.u32 %v1522, 7
        %v1524 = vsub.s32 0, %v1523
        %v1525 = vrot.slane %v1520, %v1524
        %v1526 = vlaneseq
        %v1527 = vshrl.u32 %v1526, 7
        %v1528 = vsub.s32 1, %v1527
        %v1529 = vrot.slane %v1520, %v1528
        %v1532 = vmul.f32 %v1516, %v1525
        %v1533 = vmul.f32 %v1517, %v1529
        %v1534 = vadd.f32 %v1394, %v1532
        %v1535 = vadd.f32 %v1395, %v1533
        %s1536 = sld [smem:[#allocation6 + $0x24]]
        %v1537 = vstv %s1536
        %v1538 = vmul.f32 %v1537, %v220
        %v1539 = vmul.f32 %v1537, %v221
        %s1540 = sld [smem:[#allocation6 + $0x55]]
        %v1541 = vstv %s1540
        %v1542 = vmul.f32 %v1541, %v228
        %v1543 = vmul.f32 %v1541, %v235
        %v1544 = vadd.f32 %v1538, %v1542
        %v1545 = vadd.f32 %v1539, %v1543
        %1546 = vrot.lane.b32.xlu0 %v1544, 98
        %v1547 = vpop.permute.xlu0 %1546
        %1548 = vrot.lane.b32.xlu0 %v1545, 98
        %v1549 = vpop.permute.xlu0 %1548
        %vm1550 = vcmp.lt.s32.totalorder %v296, 98
        %v1551 = vsel %vm1550, %v1547, %v1549
        %v1552 = vsel %vm1550, %v1549, %v1547
        %vm1553 = vmand %vm256, %vm265
        %v1554 = vsel %vm1553, 1, 0
        %v1555 = vcvt.s32.f32 %v1554
        %v1557 = vlaneseq
        %v1558 = vshrl.u32 %v1557, 7
        %v1559 = vsub.s32 0, %v1558
        %v1560 = vrot.slane %v1555, %v1559
        %v1561 = vlaneseq
        %v1562 = vshrl.u32 %v1561, 7
        %v1563 = vsub.s32 1, %v1562
        %v1564 = vrot.slane %v1555, %v1563
        %v1567 = vmul.f32 %v1551, %v1560
        %v1568 = vmul.f32 %v1552, %v1564
        %v1569 = vadd.f32 %v1429, %v1567
        %v1570 = vadd.f32 %v1430, %v1568
        %s1571 = sld [smem:[#allocation6 + $0x25]]
        %v1572 = vstv %s1571
        %v1573 = vmul.f32 %v1572, %v220
        %v1574 = vmul.f32 %v1572, %v221
        %s1575 = sld [smem:[#allocation6 + $0x56]]
        %v1576 = vstv %s1575
        %v1577 = vmul.f32 %v1576, %v228
        %v1578 = vmul.f32 %v1576, %v235
        %v1579 = vadd.f32 %v1573, %v1577
        %v1580 = vadd.f32 %v1574, %v1578
        %1581 = vrot.lane.b32.xlu0 %v1579, 97
        %v1582 = vpop.permute.xlu0 %1581
        %1583 = vrot.lane.b32.xlu0 %v1580, 97
        %v1584 = vpop.permute.xlu0 %1583
        %vm1585 = vcmp.lt.s32.totalorder %v296, 97
        %v1586 = vsel %vm1585, %v1582, %v1584
        %v1587 = vsel %vm1585, %v1584, %v1582
        %vm1588 = vmand %vm256, %vm268
        %v1589 = vsel %vm1588, 1, 0
        %v1590 = vcvt.s32.f32 %v1589
        %v1592 = vlaneseq
        %v1593 = vshrl.u32 %v1592, 7
        %v1594 = vsub.s32 0, %v1593
        %v1595 = vrot.slane %v1590, %v1594
        %v1596 = vlaneseq
        %v1597 = vshrl.u32 %v1596, 7
        %v1598 = vsub.s32 1, %v1597
        %v1599 = vrot.slane %v1590, %v1598
        %v1602 = vmul.f32 %v1586, %v1595
        %v1603 = vmul.f32 %v1587, %v1599
        %v1604 = vadd.f32 %v1464, %v1602
        %v1605 = vadd.f32 %v1465, %v1603
        %s1606 = sld [smem:[#allocation6 + $0x26]]
        %v1607 = vstv %s1606
        %v1608 = vmul.f32 %v1607, %v220
        %v1609 = vmul.f32 %v1607, %v221
        %s1610 = sld [smem:[#allocation6 + $0x57]]
        %v1611 = vstv %s1610
        %v1612 = vmul.f32 %v1611, %v228
        %v1613 = vmul.f32 %v1611, %v235
        %v1614 = vadd.f32 %v1608, %v1612
        %v1615 = vadd.f32 %v1609, %v1613
        %1616 = vrot.lane.b32.xlu0 %v1614, 96
        %v1617 = vpop.permute.xlu0 %1616
        %1618 = vrot.lane.b32.xlu0 %v1615, 96
        %v1619 = vpop.permute.xlu0 %1618
        %vm1620 = vcmp.lt.s32.totalorder %v296, 96
        %v1621 = vsel %vm1620, %v1617, %v1619
        %v1622 = vsel %vm1620, %v1619, %v1617
        %vm1623 = vmand %vm256, %vm271
        %v1624 = vsel %vm1623, 1, 0
        %v1625 = vcvt.s32.f32 %v1624
        %v1627 = vlaneseq
        %v1628 = vshrl.u32 %v1627, 7
        %v1629 = vsub.s32 0, %v1628
        %v1630 = vrot.slane %v1625, %v1629
        %v1631 = vlaneseq
        %v1632 = vshrl.u32 %v1631, 7
        %v1633 = vsub.s32 1, %v1632
        %v1634 = vrot.slane %v1625, %v1633
        %v1637 = vmul.f32 %v1621, %v1630
        %v1638 = vmul.f32 %v1622, %v1634
        %v1639 = vadd.f32 %v1499, %v1637
        %v1640 = vadd.f32 %v1500, %v1638
        %s1641 = sld [smem:[#allocation6 + $0x27]]
        %v1642 = vstv %s1641
        %v1643 = vmul.f32 %v1642, %v220
        %v1644 = vmul.f32 %v1642, %v221
        %s1645 = sld [smem:[#allocation6 + $0x58]]
        %v1646 = vstv %s1645
        %v1647 = vmul.f32 %v1646, %v228
        %v1648 = vmul.f32 %v1646, %v235
        %v1649 = vadd.f32 %v1643, %v1647
        %v1650 = vadd.f32 %v1644, %v1648
        %1651 = vrot.lane.b32.xlu0 %v1649, 95
        %v1652 = vpop.permute.xlu0 %1651
        %1653 = vrot.lane.b32.xlu0 %v1650, 95
        %v1654 = vpop.permute.xlu0 %1653
        %vm1655 = vcmp.lt.s32.totalorder %v296, 95
        %v1656 = vsel %vm1655, %v1652, %v1654
        %v1657 = vsel %vm1655, %v1654, %v1652
        %vm1658 = vmand %vm256, %vm274
        %v1659 = vsel %vm1658, 1, 0
        %v1660 = vcvt.s32.f32 %v1659
        %v1662 = vlaneseq
        %v1663 = vshrl.u32 %v1662, 7
        %v1664 = vsub.s32 0, %v1663
        %v1665 = vrot.slane %v1660, %v1664
        %v1666 = vlaneseq
        %v1667 = vshrl.u32 %v1666, 7
        %v1668 = vsub.s32 1, %v1667
        %v1669 = vrot.slane %v1660, %v1668
        %v1672 = vmul.f32 %v1656, %v1665
        %v1673 = vmul.f32 %v1657, %v1669
        %v1674 = vadd.f32 %v1534, %v1672
        %v1675 = vadd.f32 %v1535, %v1673
        %s1676 = sld [smem:[#allocation6 + $0x28]]
        %v1677 = vstv %s1676
        %v1678 = vmul.f32 %v1677, %v220
        %v1679 = vmul.f32 %v1677, %v221
        %s1680 = sld [smem:[#allocation6 + $0x59]]
        %v1681 = vstv %s1680
        %v1682 = vmul.f32 %v1681, %v228
        %v1683 = vmul.f32 %v1681, %v235
        %v1684 = vadd.f32 %v1678, %v1682
        %v1685 = vadd.f32 %v1679, %v1683
        %1686 = vrot.lane.b32.xlu0 %v1684, 94
        %v1687 = vpop.permute.xlu0 %1686
        %1688 = vrot.lane.b32.xlu0 %v1685, 94
        %v1689 = vpop.permute.xlu0 %1688
        %vm1690 = vcmp.lt.s32.totalorder %v296, 94
        %v1691 = vsel %vm1690, %v1687, %v1689
        %v1692 = vsel %vm1690, %v1689, %v1687
        %vm1693 = vmand %vm256, %vm277
        %v1694 = vsel %vm1693, 1, 0
        %v1695 = vcvt.s32.f32 %v1694
        %v1697 = vlaneseq
        %v1698 = vshrl.u32 %v1697, 7
        %v1699 = vsub.s32 0, %v1698
        %v1700 = vrot.slane %v1695, %v1699
        %v1701 = vlaneseq
        %v1702 = vshrl.u32 %v1701, 7
        %v1703 = vsub.s32 1, %v1702
        %v1704 = vrot.slane %v1695, %v1703
        %v1707 = vmul.f32 %v1691, %v1700
        %v1708 = vmul.f32 %v1692, %v1704
        %v1709 = vadd.f32 %v1569, %v1707
        %v1710 = vadd.f32 %v1570, %v1708
        %s1711 = sld [smem:[#allocation6 + $0x29]]
        %v1712 = vstv %s1711
        %v1713 = vmul.f32 %v1712, %v220
        %v1714 = vmul.f32 %v1712, %v221
        %s1715 = sld [smem:[#allocation6 + $0x5a]]
        %v1716 = vstv %s1715
        %v1717 = vmul.f32 %v1716, %v228
        %v1718 = vmul.f32 %v1716, %v235
        %v1719 = vadd.f32 %v1713, %v1717
        %v1720 = vadd.f32 %v1714, %v1718
        %1721 = vrot.lane.b32.xlu0 %v1719, 93
        %v1722 = vpop.permute.xlu0 %1721
        %1723 = vrot.lane.b32.xlu0 %v1720, 93
        %v1724 = vpop.permute.xlu0 %1723
        %vm1725 = vcmp.lt.s32.totalorder %v296, 93
        %v1726 = vsel %vm1725, %v1722, %v1724
        %v1727 = vsel %vm1725, %v1724, %v1722
        %vm1728 = vmand %vm256, %vm280
        %v1729 = vsel %vm1728, 1, 0
        %v1730 = vcvt.s32.f32 %v1729
        %v1732 = vlaneseq
        %v1733 = vshrl.u32 %v1732, 7
        %v1734 = vsub.s32 0, %v1733
        %v1735 = vrot.slane %v1730, %v1734
        %v1736 = vlaneseq
        %v1737 = vshrl.u32 %v1736, 7
        %v1738 = vsub.s32 1, %v1737
        %v1739 = vrot.slane %v1730, %v1738
        %v1742 = vmul.f32 %v1726, %v1735
        %v1743 = vmul.f32 %v1727, %v1739
        %v1744 = vadd.f32 %v1604, %v1742
        %v1745 = vadd.f32 %v1605, %v1743
        %s1746 = sld [smem:[#allocation6 + $0x2a]]
        %v1747 = vstv %s1746
        %v1748 = vmul.f32 %v1747, %v220
        %v1749 = vmul.f32 %v1747, %v221
        %s1750 = sld [smem:[#allocation6 + $0x5b]]
        %v1751 = vstv %s1750
        %v1752 = vmul.f32 %v1751, %v228
        %v1753 = vmul.f32 %v1751, %v235
        %v1754 = vadd.f32 %v1748, %v1752
        %v1755 = vadd.f32 %v1749, %v1753
        %1756 = vrot.lane.b32.xlu0 %v1754, 83
        %v1757 = vpop.permute.xlu0 %1756
        %1758 = vrot.lane.b32.xlu0 %v1755, 83
        %v1759 = vpop.permute.xlu0 %1758
        %vm1760 = vcmp.lt.s32.totalorder %v296, 83
        %v1761 = vsel %vm1760, %v1757, %v1759
        %v1762 = vsel %vm1760, %v1759, %v1757
        %vm1763 = vmand %vm259, %vm262
        %v1764 = vsel %vm1763, 1, 0
        %v1765 = vcvt.s32.f32 %v1764
        %v1767 = vlaneseq
        %v1768 = vshrl.u32 %v1767, 7
        %v1769 = vsub.s32 0, %v1768
        %v1770 = vrot.slane %v1765, %v1769
        %v1771 = vlaneseq
        %v1772 = vshrl.u32 %v1771, 7
        %v1773 = vsub.s32 1, %v1772
        %v1774 = vrot.slane %v1765, %v1773
        %v1777 = vmul.f32 %v1761, %v1770
        %v1778 = vmul.f32 %v1762, %v1774
        %v1779 = vadd.f32 %v1639, %v1777
        %v1780 = vadd.f32 %v1640, %v1778
        %s1781 = sld [smem:[#allocation6 + $0x2b]]
        %v1782 = vstv %s1781
        %v1783 = vmul.f32 %v1782, %v220
        %v1784 = vmul.f32 %v1782, %v221
        %s1785 = sld [smem:[#allocation6 + $0x5c]]
        %v1786 = vstv %s1785
        %v1787 = vmul.f32 %v1786, %v228
        %v1788 = vmul.f32 %v1786, %v235
        %v1789 = vadd.f32 %v1783, %v1787
        %v1790 = vadd.f32 %v1784, %v1788
        %1791 = vrot.lane.b32.xlu0 %v1789, 82
        %v1792 = vpop.permute.xlu0 %1791
        %1793 = vrot.lane.b32.xlu0 %v1790, 82
        %v1794 = vpop.permute.xlu0 %1793
        %vm1795 = vcmp.lt.s32.totalorder %v296, 82
        %v1796 = vsel %vm1795, %v1792, %v1794
        %v1797 = vsel %vm1795, %v1794, %v1792
        %vm1798 = vmand %vm259, %vm265
        %v1799 = vsel %vm1798, 1, 0
        %v1800 = vcvt.s32.f32 %v1799
        %v1802 = vlaneseq
        %v1803 = vshrl.u32 %v1802, 7
        %v1804 = vsub.s32 0, %v1803
        %v1805 = vrot.slane %v1800, %v1804
        %v1806 = vlaneseq
        %v1807 = vshrl.u32 %v1806, 7
        %v1808 = vsub.s32 1, %v1807
        %v1809 = vrot.slane %v1800, %v1808
        %v1812 = vmul.f32 %v1796, %v1805
        %v1813 = vmul.f32 %v1797, %v1809
        %v1814 = vadd.f32 %v1674, %v1812
        %v1815 = vadd.f32 %v1675, %v1813
        %s1816 = sld [smem:[#allocation6 + $0x2c]]
        %v1817 = vstv %s1816
        %v1818 = vmul.f32 %v1817, %v220
        %v1819 = vmul.f32 %v1817, %v221
        %s1820 = sld [smem:[#allocation6 + $0x5d]]
        %v1821 = vstv %s1820
        %v1822 = vmul.f32 %v1821, %v228
        %v1823 = vmul.f32 %v1821, %v235
        %v1824 = vadd.f32 %v1818, %v1822
        %v1825 = vadd.f32 %v1819, %v1823
        %1826 = vrot.lane.b32.xlu0 %v1824, 81
        %v1827 = vpop.permute.xlu0 %1826
        %1828 = vrot.lane.b32.xlu0 %v1825, 81
        %v1829 = vpop.permute.xlu0 %1828
        %vm1830 = vcmp.lt.s32.totalorder %v296, 81
        %v1831 = vsel %vm1830, %v1827, %v1829
        %v1832 = vsel %vm1830, %v1829, %v1827
        %vm1833 = vmand %vm259, %vm268
        %v1834 = vsel %vm1833, 1, 0
        %v1835 = vcvt.s32.f32 %v1834
        %v1837 = vlaneseq
        %v1838 = vshrl.u32 %v1837, 7
        %v1839 = vsub.s32 0, %v1838
        %v1840 = vrot.slane %v1835, %v1839
        %v1841 = vlaneseq
        %v1842 = vshrl.u32 %v1841, 7
        %v1843 = vsub.s32 1, %v1842
        %v1844 = vrot.slane %v1835, %v1843
        %v1847 = vmul.f32 %v1831, %v1840
        %v1848 = vmul.f32 %v1832, %v1844
        %v1849 = vadd.f32 %v1709, %v1847
        %v1850 = vadd.f32 %v1710, %v1848
        %s1851 = sld [smem:[#allocation6 + $0x2d]]
        %v1852 = vstv %s1851
        %v1853 = vmul.f32 %v1852, %v220
        %v1854 = vmul.f32 %v1852, %v221
        %s1855 = sld [smem:[#allocation6 + $0x5e]]
        %v1856 = vstv %s1855
        %v1857 = vmul.f32 %v1856, %v228
        %v1858 = vmul.f32 %v1856, %v235
        %v1859 = vadd.f32 %v1853, %v1857
        %v1860 = vadd.f32 %v1854, %v1858
        %1861 = vrot.lane.b32.xlu0 %v1859, 80
        %v1862 = vpop.permute.xlu0 %1861
        %1863 = vrot.lane.b32.xlu0 %v1860, 80
        %v1864 = vpop.permute.xlu0 %1863
        %vm1865 = vcmp.lt.s32.totalorder %v296, 80
        %v1866 = vsel %vm1865, %v1862, %v1864
        %v1867 = vsel %vm1865, %v1864, %v1862
        %vm1868 = vmand %vm259, %vm271
        %v1869 = vsel %vm1868, 1, 0
        %v1870 = vcvt.s32.f32 %v1869
        %v1872 = vlaneseq
        %v1873 = vshrl.u32 %v1872, 7
        %v1874 = vsub.s32 0, %v1873
        %v1875 = vrot.slane %v1870, %v1874
        %v1876 = vlaneseq
        %v1877 = vshrl.u32 %v1876, 7
        %v1878 = vsub.s32 1, %v1877
        %v1879 = vrot.slane %v1870, %v1878
        %v1882 = vmul.f32 %v1866, %v1875
        %v1883 = vmul.f32 %v1867, %v1879
        %v1884 = vadd.f32 %v1744, %v1882
        %v1885 = vadd.f32 %v1745, %v1883
        %s1886 = sld [smem:[#allocation6 + $0x2e]]
        %v1887 = vstv %s1886
        %v1888 = vmul.f32 %v1887, %v220
        %v1889 = vmul.f32 %v1887, %v221
        %s1890 = sld [smem:[#allocation6 + $0x5f]]
        %v1891 = vstv %s1890
        %v1892 = vmul.f32 %v1891, %v228
        %v1893 = vmul.f32 %v1891, %v235
        %v1894 = vadd.f32 %v1888, %v1892
        %v1895 = vadd.f32 %v1889, %v1893
        %1896 = vrot.lane.b32.xlu0 %v1894, 79
        %v1897 = vpop.permute.xlu0 %1896
        %1898 = vrot.lane.b32.xlu0 %v1895, 79
        %v1899 = vpop.permute.xlu0 %1898
        %vm1900 = vcmp.lt.s32.totalorder %v296, 79
        %v1901 = vsel %vm1900, %v1897, %v1899
        %v1902 = vsel %vm1900, %v1899, %v1897
        %vm1903 = vmand %vm259, %vm274
        %v1904 = vsel %vm1903, 1, 0
        %v1905 = vcvt.s32.f32 %v1904
        %v1907 = vlaneseq
        %v1908 = vshrl.u32 %v1907, 7
        %v1909 = vsub.s32 0, %v1908
        %v1910 = vrot.slane %v1905, %v1909
        %v1911 = vlaneseq
        %v1912 = vshrl.u32 %v1911, 7
        %v1913 = vsub.s32 1, %v1912
        %v1914 = vrot.slane %v1905, %v1913
        %v1917 = vmul.f32 %v1901, %v1910
        %v1918 = vmul.f32 %v1902, %v1914
        %v1919 = vadd.f32 %v1779, %v1917
        %v1920 = vadd.f32 %v1780, %v1918
        %s1921 = sld [smem:[#allocation6 + $0x2f]]
        %v1922 = vstv %s1921
        %v1923 = vmul.f32 %v1922, %v220
        %v1924 = vmul.f32 %v1922, %v221
        %s1925 = sld [smem:[#allocation6 + $0x60]]
        %v1926 = vstv %s1925
        %v1927 = vmul.f32 %v1926, %v228
        %v1928 = vmul.f32 %v1926, %v235
        %v1929 = vadd.f32 %v1923, %v1927
        %v1930 = vadd.f32 %v1924, %v1928
        %1931 = vrot.lane.b32.xlu0 %v1929, 78
        %v1932 = vpop.permute.xlu0 %1931
        %1933 = vrot.lane.b32.xlu0 %v1930, 78
        %v1934 = vpop.permute.xlu0 %1933
        %vm1935 = vcmp.lt.s32.totalorder %v296, 78
        %v1936 = vsel %vm1935, %v1932, %v1934
        %v1937 = vsel %vm1935, %v1934, %v1932
        %vm1938 = vmand %vm259, %vm277
        %v1939 = vsel %vm1938, 1, 0
        %v1940 = vcvt.s32.f32 %v1939
        %v1942 = vlaneseq
        %v1943 = vshrl.u32 %v1942, 7
        %v1944 = vsub.s32 0, %v1943
        %v1945 = vrot.slane %v1940, %v1944
        %v1946 = vlaneseq
        %v1947 = vshrl.u32 %v1946, 7
        %v1948 = vsub.s32 1, %v1947
        %v1949 = vrot.slane %v1940, %v1948
        %v1952 = vmul.f32 %v1936, %v1945
        %v1953 = vmul.f32 %v1937, %v1949
        %v1954 = vadd.f32 %v1814, %v1952
        %v1955 = vadd.f32 %v1815, %v1953
        %s1956 = sld [smem:[#allocation6 + $0x30]]
        %v1957 = vstv %s1956
        %v1958 = vmul.f32 %v1957, %v220
        %v1959 = vmul.f32 %v1957, %v221
        %s1960 = sld [smem:[#allocation6 + $0x61]]
        %v1961 = vstv %s1960
        %v1962 = vmul.f32 %v1961, %v228
        %v1963 = vmul.f32 %v1961, %v235
        %v1964 = vadd.f32 %v1958, %v1962
        %v1965 = vadd.f32 %v1959, %v1963
        %1966 = vrot.lane.b32.xlu0 %v1964, 77
        %v1967 = vpop.permute.xlu0 %1966
        %1968 = vrot.lane.b32.xlu0 %v1965, 77
        %v1969 = vpop.permute.xlu0 %1968
        %vm1970 = vcmp.lt.s32.totalorder %v296, 77
        %v1971 = vsel %vm1970, %v1967, %v1969
        %v1972 = vsel %vm1970, %v1969, %v1967
        %vm1973 = vmand %vm259, %vm280
        %v1974 = vsel %vm1973, 1, 0
        %v1975 = vcvt.s32.f32 %v1974
        %v1977 = vlaneseq
        %v1978 = vshrl.u32 %v1977, 7
        %v1979 = vsub.s32 0, %v1978
        %v1980 = vrot.slane %v1975, %v1979
        %v1981 = vlaneseq
        %v1982 = vshrl.u32 %v1981, 7
        %v1983 = vsub.s32 1, %v1982
        %v1984 = vrot.slane %v1975, %v1983
        %v1987 = vmul.f32 %v1971, %v1980
        %v1988 = vmul.f32 %v1972, %v1984
        %v1989 = vadd.f32 %v1849, %v1987
        %v1990 = vadd.f32 %v1850, %v1988
        %v1991 = vadd.f32 %v1989, %v1884
        %v1992 = vadd.f32 %v1990, %v1885
        %v1993 = vadd.f32 %v1919, %v1954
        %v1994 = vadd.f32 %v1920, %v1955
        %v1995 = vadd.f32 %v1991, %v1993
        %v1996 = vadd.f32 %v1992, %v1994
        %v1997 = vsub.f32 0.0, %v1995
        %v1998 = vsub.f32 0.0, %v1996
        %v1999 = vmul.f32 %v1997, 1.442695
        %v2000 = vpow.pop %v1999
        %v2001 = vmul.f32 %v1998, 1.442695
        %v2002 = vpow.pop %v2001
        %v2003 = vadd.f32 %v2000, 1.0
        %v2004 = vadd.f32 %v2002, 1.0
        %v2005 = vrcp.pop %v2003
        %v2006 = vmul.f32 1.0, %v2005
        %v2007 = vrcp.pop %v2004
        %v2008 = vmul.f32 1.0, %v2007
        %v2009 = vlaneseq
        %v2010 = vshrl.u32 %v2009, 7
        %v2011 = vsub.s32 0, %v2010
        %v2012 = vrot.slane %v2006, %v2011
        %v2013 = vlaneseq
        %v2014 = vshrl.u32 %v2013, 7
        %v2015 = vsub.s32 0, %v2014
        %v2016 = vrot.slane %v2008, %v2015
        %v2019 = vcombine.low %v2012, %v2016
        %v2021 = vmul.f32 %v201, %v2019
        %2022 = vst [vmem:[%s200] sm:$0xff] %v2021
        %s2023 = sand.u32 %s97, 1
        %s2024 = scalar_lea.sflag [#allocation4], %s2023
        %s2025 = sand.u32 %s97, 1
        %s2026 = smul.addr %s2025, 8
        %s2027 = scalar_lea.vmem [#allocation7], %s2026
        // Predicated region
        $region41: #{tpu_custom_call.1} parent=31 // pred_check
          %p2028 = pneg %p107
        $region42: #{tpu_custom_call.1} parent=31 // pred_check_branch
          %2030 = sbr.rel (%p2028) target = $region44
        $region43: #{tpu_custom_call.1} parent=31 // pred_region
          %s2032 = ssub.s32 128, 128
          %2033 = vsyncadd %s2024, %s2032
          %s2034 = smul.addr %s21, 2
          %s2035 = smul.addr %s2034, 64
          %s2036 = scalar_lea.hbm %s3, %s2035
          %s2038 = sshll.u32 %s2027, 4
          %s2039 = int_to_ptr.vmem [resolvable:$true] %s2038
          %2041 = dma.vmem_to_hbm [thread:$0]  %s2039, 128, %s2036, %s2024
        $region44: #{tpu_custom_call.1} parent=31 // pred_fallthru
          _
      $region32: #{tpu_custom_call.1} parent=5 // pred_fallthru
        _
      %p2042 = scmp.le.s32.totalorder 2, %s16
      // Predicated region
      $region45: #{tpu_custom_call.1} parent=5 // pred_check
        %p2043 = pneg %p2042
      $region46: #{tpu_custom_call.1} parent=5 // pred_check_branch
        %2045 = sbr.rel (%p2043) target = $region48
      $region47: #{tpu_custom_call.1} parent=5 // pred_region
        %s2046 = ssub.s32 %s16, 2
        // Predicated region
        $region49: #{tpu_custom_call.1} parent=47 // pred_check
          %p2047 = pneg %p113
        $region50: #{tpu_custom_call.1} parent=47 // pred_check_branch
          %2049 = sbr.rel (%p2047) target = $region52
        $region51: #{tpu_custom_call.1} parent=47 // pred_region
          %s2050 = sand.u32 %s98, 1
          %s2051 = scalar_lea.sflag [#allocation4], %s2050
          %s2052 = sand.u32 %s98, 1
          %s2053 = smul.addr %s2052, 8
          %s2054 = scalar_lea.vmem [#allocation7], %s2053
          %2055 = dma.done %s2051, 128
        $region52: #{tpu_custom_call.1} parent=47 // pred_fallthru
          _
      $region48: #{tpu_custom_call.1} parent=5 // pred_fallthru
        _
    $region6: #{tpu_custom_call.1} parent=1 // loop_footer
      %s20 = sadd.s32 1, %s16
    $region7: #{tpu_custom_call.1} parent=1 // loop_footer_branch
      %15 = sbr.rel target = $region3
    $region8: #{tpu_custom_call.1} parent=1 // loop_exit
      _
    %2056 = vsyncpa [#allocation3], 1
    %s2057 = scalar_lea.sflag [#allocation3], 1
    %2058 = vsyncpa %s2057, 1
    %2059 = vsyncpa [#allocation4], 1
    %s2060 = scalar_lea.sflag [#allocation4], 1
    %2061 = vsyncpa %s2060, 1
    %2062 = vsyncpa [#allocation5], 1
    %s2063 = scalar_lea.sflag [#allocation5], 1
    %2064 = vsyncpa %s2063, 1

</llo_original>
